<compile_context>
chip_gen: v7x
topology: tpu7x:2x2x1
jax: 0.10.0
libtpu: 0.0.40
codegen_flags: <defaults>
</compile_context>

<pallas_src>
import jax
import jax.numpy as jnp
from jax import lax
from jax.experimental import pallas as pl
from jax.experimental.pallas import tpu as pltpu

EPS = 1e-5


def _bn_conv_bn_kernel(x_ref, w_ref, p_ref, o_ref):
    # x_ref : [C, M] f32 activations (channels on sublanes, spatial on lanes)
    # w_ref : [C, C] bf16 1x1-conv weight, PyTorch layout (out_ch, in_ch)
    # p_ref : [C, 4] f32 packed per-channel params: (gamma1, beta1, gamma2, beta2)
    # o_ref : [C, M] f32
    x = x_ref[...]                                # f32 [C, M]
    m = x.shape[-1]
    inv_m = 1.0 / m

    p = p_ref[...]
    g1 = p[:, 0:1]
    b1 = p[:, 1:2]
    g2 = p[:, 2:3]
    b2 = p[:, 3:4]

    # ---- BatchNorm 1 (training mode): one-pass stats, folded scale/shift ----
    mean1 = jnp.sum(x, axis=-1, keepdims=True) * inv_m          # [C, 1]
    ex2_1 = jnp.sum(x * x, axis=-1, keepdims=True) * inv_m      # E[x^2]
    var1 = jnp.maximum(ex2_1 - mean1 * mean1, 0.0)  # clamp: one-pass var can go <0
    scale1 = g1 * lax.rsqrt(var1 + EPS)             # rsqrt -> EUP slot (cheap)
    shift1 = b1 - mean1 * scale1
    y = x * scale1 + shift1                         # single FMA pass

    # ---- 1x1 conv == channel matmul on the MXU:  z = W @ y ----
    # Explicit bf16 operands -> single MXU pass on all generations; f32 accum.
    z = jnp.dot(w_ref[...], y.astype(jnp.bfloat16),
                preferred_element_type=jnp.float32)             # [C, M] f32

    # ---- BatchNorm 2 (training mode): one-pass stats, folded scale/shift ----
    mean2 = jnp.sum(z, axis=-1, keepdims=True) * inv_m
    ex2_2 = jnp.sum(z * z, axis=-1, keepdims=True) * inv_m
    var2 = jnp.maximum(ex2_2 - mean2 * mean2, 0.0)
    scale2 = g2 * lax.rsqrt(var2 + EPS)
    shift2 = b2 - mean2 * scale2
    o_ref[...] = (z * scale2 + shift2).astype(o_ref.dtype)


# ----- one-time (per-model) parameter preparation, hoisted out of the call path -----

def prepare_weight(w_conv):
    """[C_out, C_in, 1, 1] (or [C_out, C_in]) conv weight -> persistent bf16 [C_out, C_in]."""
    w2d = w_conv.reshape(w_conv.shape[0], w_conv.shape[1])
    return w2d.astype(jnp.bfloat16)


def prepare_params(gamma1, beta1, gamma2, beta2):
    """Pack the four per-channel BN vectors once into a persistent [C, 4] f32 buffer."""
    return jnp.stack([gamma1, beta1, gamma2, beta2], axis=1).astype(jnp.float32)


# ----- per-call path -----

def _bn_conv_bn_impl(x_nchw, w_bf16, params):
    """x_nchw: [N, C, H, W] f32.  w_bf16: [C_out, C_in] bf16.  params: [C, 4] f32."""
    N, C, H, W = x_nchw.shape
    M = N * H * W

    if N == 1:
        x2d = x_nchw.reshape(C, M)        # free (metadata) reshape, no transpose
    else:
        # TODO(synk): N > 1 pays a wrapper transpose (2 extra HBM passes); if it
        # ever matters, handle it with a grid + per-block partial BN accumulators.
        x2d = jnp.transpose(x_nchw, (1, 0, 2, 3)).reshape(C, M)

    vmem = pl.BlockSpec(memory_space=pltpu.MemorySpace.VMEM)
    out2d = pl.pallas_call(
        _bn_conv_bn_kernel,
        out_shape=jax.ShapeDtypeStruct((C, M), jnp.float32),
        in_specs=[vmem, vmem, vmem],
        out_specs=vmem,
        input_output_aliases={0: 0},      # x2d is dead after the call; reuse its buffer
    )(x2d, w_bf16, params)

    if N == 1:
        return out2d.reshape(N, C, H, W)  # free reshape back to NCHW
    return jnp.transpose(out2d.reshape(C, N, H, W), (1, 0, 2, 3))


bn_conv_bn = jax.jit(_bn_conv_bn_impl)


# ----- pure-JAX reference (training-mode BN semantics) -----

def _reference(x_nchw, gamma1, beta1, w_conv, gamma2, beta2, matmul_dtype=jnp.float32):
    def bn(x, g, b):
        mean = jnp.mean(x, axis=(0, 2, 3), keepdims=True)
        var = jnp.mean((x - mean) ** 2, axis=(0, 2, 3), keepdims=True)
        return (x - mean) / jnp.sqrt(var + EPS) * g.reshape(1, -1, 1, 1) \
               + b.reshape(1, -1, 1, 1)

    y = bn(x_nchw, gamma1, beta1)
    w2d = w_conv.reshape(w_conv.shape[0], w_conv.shape[1])
    z = jnp.einsum("nchw,oc->nohw",
                   y.astype(matmul_dtype), w2d.astype(matmul_dtype),
                   preferred_element_type=jnp.float32,
                   precision=lax.Precision.HIGHEST)              # true-f32 spec path
    return bn(z, gamma2, beta2)


if __name__ == "__main__":
    key = jax.random.PRNGKey(0)
    k_x, k_w, k_g1, k_b1, k_g2, k_b2 = jax.random.split(key, 6)

    # Shapes implied by the module: Conv2d(244, 244, 1x1) on a 1x244x14x14 input.
    N, C, H, W = 1, 244, 14, 14
    x = jax.random.normal(k_x, (N, C, H, W), dtype=jnp.float32)

    # Deterministic synthetic parameters.
    w_conv = jax.random.normal(k_w, (C, C, 1, 1), dtype=jnp.float32) * (1.0 / jnp.sqrt(C))
    gamma1 = 1.0 + 0.1 * jax.random.normal(k_g1, (C,), dtype=jnp.float32)
    beta1 = 0.1 * jax.random.normal(k_b1, (C,), dtype=jnp.float32)
    gamma2 = 1.0 + 0.1 * jax.random.normal(k_g2, (C,), dtype=jnp.float32)
    beta2 = 0.1 * jax.random.normal(k_b2, (C,), dtype=jnp.float32)

    # Hoisted once per model: bf16 weight + packed [C, 4] BN params.
    w_bf16 = prepare_weight(w_conv)
    params = prepare_params(gamma1, beta1, gamma2, beta2)

    out = bn_conv_bn(x, w_bf16, params)
    out = jax.block_until_ready(out)
    assert out.shape == (N, C, H, W)
    assert bool(jnp.all(jnp.isfinite(out)))

    # Tight check against a reference using the same deliberate bf16 matmul operands.
    ref_bf16 = _reference(x, gamma1, beta1, w_conv, gamma2, beta2,
                          matmul_dtype=jnp.bfloat16)
    assert jnp.allclose(out, ref_bf16, atol=5e-3, rtol=5e-3), \
        "mismatch vs bf16-matched reference"

    # Loose check against the full-f32 spec; bf16 MXU operands + BN2
    # renormalization keep the deviation well inside this bound.
    ref_f32 = _reference(x, gamma1, beta1, w_conv, gamma2, beta2,
                         matmul_dtype=jnp.float32)
    assert jnp.allclose(out, ref_f32, atol=3e-2, rtol=3e-2), \
        "mismatch vs f32 reference"

    print("KERNEL_OK")
</pallas_src>

<mosaic_0001>
module attributes {stable_mosaic.version = 11 : i64} {
  func.func @_bn_conv_bn_kernel(%arg0: memref<244x196xf32, #tpu.memory_space<vmem>>, %arg1: memref<244x244xbf16, #tpu.memory_space<vmem>>, %arg2: memref<244x4xf32, #tpu.memory_space<vmem>>, %arg3: memref<244x196xf32, #tpu.memory_space<vmem>>) attributes {dimension_semantics = [], scalar_prefetch = 0 : i64, scratch_operands = 0 : i64, tpu.core_type = #tpu.core_type<tc>} {
    %c0 = arith.constant 0 : index
    %c0_0 = arith.constant 0 : index
    %0 = vector.load %arg0[%c0, %c0_0] : memref<244x196xf32, #tpu.memory_space<vmem>>, vector<244x196xf32>
    %c0_1 = arith.constant 0 : index
    %c0_2 = arith.constant 0 : index
    %1 = vector.load %arg2[%c0_1, %c0_2] : memref<244x4xf32, #tpu.memory_space<vmem>>, vector<244x4xf32>
    %2 = vector.extract_strided_slice %1 {offsets = [0, 0], sizes = [244, 1], strides = [1, 1]} : vector<244x4xf32> to vector<244x1xf32>
    %3 = vector.extract_strided_slice %1 {offsets = [0, 1], sizes = [244, 1], strides = [1, 1]} : vector<244x4xf32> to vector<244x1xf32>
    %4 = vector.extract_strided_slice %1 {offsets = [0, 2], sizes = [244, 1], strides = [1, 1]} : vector<244x4xf32> to vector<244x1xf32>
    %5 = vector.extract_strided_slice %1 {offsets = [0, 3], sizes = [244, 1], strides = [1, 1]} : vector<244x4xf32> to vector<244x1xf32>
    %cst = arith.constant dense<0.000000e+00> : vector<244xf32>
    %6 = vector.multi_reduction <add>, %0, %cst [1] : vector<244x196xf32> to vector<244xf32>
    %7 = vector.shape_cast %6 : vector<244xf32> to vector<244x1xf32>
    %cst_3 = arith.constant 0.00510204071 : f32
    %8 = vector.broadcast %cst_3 : f32 to vector<244x1xf32>
    %9 = arith.mulf %7, %8 : vector<244x1xf32>
    %10 = arith.mulf %0, %0 : vector<244x196xf32>
    %cst_4 = arith.constant dense<0.000000e+00> : vector<244xf32>
    %11 = vector.multi_reduction <add>, %10, %cst_4 [1] : vector<244x196xf32> to vector<244xf32>
    %12 = vector.shape_cast %11 : vector<244xf32> to vector<244x1xf32>
    %cst_5 = arith.constant 0.00510204071 : f32
    %13 = vector.broadcast %cst_5 : f32 to vector<244x1xf32>
    %14 = arith.mulf %12, %13 : vector<244x1xf32>
    %15 = arith.mulf %9, %9 : vector<244x1xf32>
    %16 = arith.subf %14, %15 : vector<244x1xf32>
    %cst_6 = arith.constant 0.000000e+00 : f32
    %17 = vector.broadcast %cst_6 : f32 to vector<244x1xf32>
    %18 = arith.maximumf %16, %17 : vector<244x1xf32>
    %cst_7 = arith.constant 9.99999974E-6 : f32
    %19 = vector.broadcast %cst_7 : f32 to vector<244x1xf32>
    %20 = arith.addf %18, %19 : vector<244x1xf32>
    %21 = math.rsqrt %20 : vector<244x1xf32>
    %22 = arith.mulf %2, %21 : vector<244x1xf32>
    %23 = arith.mulf %9, %22 : vector<244x1xf32>
    %24 = arith.subf %3, %23 : vector<244x1xf32>
    %25 = vector.broadcast %22 : vector<244x1xf32> to vector<244x196xf32>
    %26 = arith.mulf %0, %25 : vector<244x196xf32>
    %27 = vector.broadcast %24 : vector<244x1xf32> to vector<244x196xf32>
    %28 = arith.addf %26, %27 : vector<244x196xf32>
    %c0_8 = arith.constant 0 : index
    %c0_9 = arith.constant 0 : index
    %29 = vector.load %arg1[%c0_8, %c0_9] : memref<244x244xbf16, #tpu.memory_space<vmem>>, vector<244x244xbf16>
    %30 = arith.truncf %28 : vector<244x196xf32> to vector<244x196xbf16>
    %cst_10 = arith.constant dense<0.000000e+00> : vector<244x196xf32>
    %31 = tpu.matmul %29, %30, %cst_10 {dimension_numbers = #tpu.dot_dimension_numbers<[1], [0], [0], [1], [0, 0, 1, 1], [], []>} : vector<244x244xbf16>, vector<244x196xbf16>, vector<244x196xf32> -> vector<244x196xf32>
    %cst_11 = arith.constant dense<0.000000e+00> : vector<244xf32>
    %32 = vector.multi_reduction <add>, %31, %cst_11 [1] : vector<244x196xf32> to vector<244xf32>
    %33 = vector.shape_cast %32 : vector<244xf32> to vector<244x1xf32>
    %cst_12 = arith.constant 0.00510204071 : f32
    %34 = vector.broadcast %cst_12 : f32 to vector<244x1xf32>
    %35 = arith.mulf %33, %34 : vector<244x1xf32>
    %36 = arith.mulf %31, %31 : vector<244x196xf32>
    %cst_13 = arith.constant dense<0.000000e+00> : vector<244xf32>
    %37 = vector.multi_reduction <add>, %36, %cst_13 [1] : vector<244x196xf32> to vector<244xf32>
    %38 = vector.shape_cast %37 : vector<244xf32> to vector<244x1xf32>
    %cst_14 = arith.constant 0.00510204071 : f32
    %39 = vector.broadcast %cst_14 : f32 to vector<244x1xf32>
    %40 = arith.mulf %38, %39 : vector<244x1xf32>
    %41 = arith.mulf %35, %35 : vector<244x1xf32>
    %42 = arith.subf %40, %41 : vector<244x1xf32>
    %cst_15 = arith.constant 0.000000e+00 : f32
    %43 = vector.broadcast %cst_15 : f32 to vector<244x1xf32>
    %44 = arith.maximumf %42, %43 : vector<244x1xf32>
    %cst_16 = arith.constant 9.99999974E-6 : f32
    %45 = vector.broadcast %cst_16 : f32 to vector<244x1xf32>
    %46 = arith.addf %44, %45 : vector<244x1xf32>
    %47 = math.rsqrt %46 : vector<244x1xf32>
    %48 = arith.mulf %4, %47 : vector<244x1xf32>
    %49 = arith.mulf %35, %48 : vector<244x1xf32>
    %50 = arith.subf %5, %49 : vector<244x1xf32>
    %51 = vector.broadcast %48 : vector<244x1xf32> to vector<244x196xf32>
    %52 = arith.mulf %31, %51 : vector<244x196xf32>
    %53 = vector.broadcast %50 : vector<244x1xf32> to vector<244x196xf32>
    %54 = arith.addf %52, %53 : vector<244x196xf32>
    %c0_17 = arith.constant 0 : index
    %c0_18 = arith.constant 0 : index
    %55 = vector.load %arg3[%c0_17, %c0_18] : memref<244x196xf32, #tpu.memory_space<vmem>>, vector<244x196xf32>
    tpu.vector_store %arg3[%c0_17, %c0_18], %54 {strides = array<i32>} : memref<244x196xf32, #tpu.memory_space<vmem>>, vector<244x196xf32>,
    return
  }
}

</mosaic_0001>

<llo_original>
// kernel: _bn_conv_bn_impl.1
$region0: #{_bn_conv_bn_impl.1}
  #allocation0 [shape = 'u32[]', space=smem, size = 0x4, offset = 0x4, fixed_abs, tag = 'smem constant byte address 0x4 - core index']
  #allocation1 [shape = 'u32[144,128]{1,0:T(1,128)}', space=vmem, size = 0x12000, scoped, tag = 'internal scratch']
  %s0 = inlined_call_operand.vmem [shape: f32[244,196], index: 0, kind: input, shape index: {}, may-alias: {0,3}]
  %s1 = inlined_call_operand.vmem [shape: bf16[244,244], index: 1, kind: input, shape index: {}]
  %s2 = inlined_call_operand.vmem [shape: f32[244,4], index: 2, kind: input, shape index: {}]
  %s3 = inlined_call_operand.vmem [shape: f32[244,196], index: 3, kind: output, shape index: {}, may-alias: {0,3}]
  %s4 = sld [smem:[#allocation0]]
  $region22: #{_bn_conv_bn_impl.1} parent=0
    _
  %s6 = ssub.s32 1, %s4
  %s7 = scalar_select 0, %s6, %s4
  // Predicated region
  $region2: #{_bn_conv_bn_impl.1} parent=0 // pred_check
    _
  $region3: #{_bn_conv_bn_impl.1} parent=0 // pred_check_branch
    %9 = sbr.rel (0) target = $region5
  $region4: #{_bn_conv_bn_impl.1} parent=0 // pred_region
    _
  $region5: #{_bn_conv_bn_impl.1} parent=0 // pred_fallthru
    _
  // Predicated region
  $region6: #{_bn_conv_bn_impl.1} parent=0 // pred_check
    _
  $region7: #{_bn_conv_bn_impl.1} parent=0 // pred_check_branch
    %11 = sbr.rel (0) target = $region9
  $region8: #{_bn_conv_bn_impl.1} parent=0 // pred_region
    _
  $region9: #{_bn_conv_bn_impl.1} parent=0 // pred_fallthru
    _
  // Predicated region
  $region10: #{_bn_conv_bn_impl.1} parent=0 // pred_check
    _
  $region11: #{_bn_conv_bn_impl.1} parent=0 // pred_check_branch
    %13 = sbr.rel (0) target = $region13
  $region12: #{_bn_conv_bn_impl.1} parent=0 // pred_region
    _
  $region13: #{_bn_conv_bn_impl.1} parent=0 // pred_fallthru
    _
  %v14 = vld [vmem:[%s0] sm:$0xff]
  %v15 = vld [vmem:[%s0 + $0x8] sm:$0xff]
  %v16 = vld [vmem:[%s0 + $0x10] sm:$0xff]
  %v17 = vld [vmem:[%s0 + $0x18] sm:$0xff]
  %v18 = vld [vmem:[%s0 + $0x20] sm:$0xff]
  %v19 = vld [vmem:[%s0 + $0x28] sm:$0xff]
  %v20 = vld [vmem:[%s0 + $0x30] sm:$0xff]
  %v21 = vld [vmem:[%s0 + $0x38] sm:$0xff]
  %v22 = vld [vmem:[%s0 + $0x40] sm:$0xff]
  %v23 = vld [vmem:[%s0 + $0x48] sm:$0xff]
  %v24 = vld [vmem:[%s0 + $0x50] sm:$0xff]
  %v25 = vld [vmem:[%s0 + $0x58] sm:$0xff]
  %v26 = vld [vmem:[%s0 + $0x60] sm:$0xff]
  %v27 = vld [vmem:[%s0 + $0x68] sm:$0xff]
  %v28 = vld [vmem:[%s0 + $0x70] sm:$0xff]
  %v29 = vld [vmem:[%s0 + $0x78] sm:$0xff]
  %v30 = vld [vmem:[%s0 + $0x80] sm:$0xff]
  %v31 = vld [vmem:[%s0 + $0x88] sm:$0xff]
  %v32 = vld [vmem:[%s0 + $0x90] sm:$0xff]
  %v33 = vld [vmem:[%s0 + $0x98] sm:$0xff]
  %v34 = vld [vmem:[%s0 + $0xa0] sm:$0xff]
  %v35 = vld [vmem:[%s0 + $0xa8] sm:$0xff]
  %v36 = vld [vmem:[%s0 + $0xb0] sm:$0xff]
  %v37 = vld [vmem:[%s0 + $0xb8] sm:$0xff]
  %v38 = vld [vmem:[%s0 + $0xc0] sm:$0xff]
  %v39 = vld [vmem:[%s0 + $0xc8] sm:$0xff]
  %v40 = vld [vmem:[%s0 + $0xd0] sm:$0xff]
  %v41 = vld [vmem:[%s0 + $0xd8] sm:$0xff]
  %v42 = vld [vmem:[%s0 + $0xe0] sm:$0xff]
  %v43 = vld [vmem:[%s0 + $0xe8] sm:$0xff]
  %v44 = vld [vmem:[%s0 + $0xf0] sm:$0xff]
  %v45 = vld [vmem:[%s0 + $0xf8] sm:$0xff]
  %v46 = vld [vmem:[%s0 + $0x100] sm:$0xff]
  %v47 = vld [vmem:[%s0 + $0x108] sm:$0xff]
  %v48 = vld [vmem:[%s0 + $0x110] sm:$0xff]
  %v49 = vld [vmem:[%s0 + $0x118] sm:$0xff]
  %v50 = vld [vmem:[%s0 + $0x120] sm:$0xff]
  %v51 = vld [vmem:[%s0 + $0x128] sm:$0xff]
  %v52 = vld [vmem:[%s0 + $0x130] sm:$0xff]
  %v53 = vld [vmem:[%s0 + $0x138] sm:$0xff]
  %v54 = vld [vmem:[%s0 + $0x140] sm:$0xff]
  %v55 = vld [vmem:[%s0 + $0x148] sm:$0xff]
  %v56 = vld [vmem:[%s0 + $0x150] sm:$0xff]
  %v57 = vld [vmem:[%s0 + $0x158] sm:$0xff]
  %v58 = vld [vmem:[%s0 + $0x160] sm:$0xff]
  %v59 = vld [vmem:[%s0 + $0x168] sm:$0xff]
  %v60 = vld [vmem:[%s0 + $0x170] sm:$0xff]
  %v61 = vld [vmem:[%s0 + $0x178] sm:$0xff]
  %v62 = vld [vmem:[%s0 + $0x180] sm:$0xff]
  %v63 = vld [vmem:[%s0 + $0x188] sm:$0xff]
  %v64 = vld [vmem:[%s0 + $0x190] sm:$0xff]
  %v65 = vld [vmem:[%s0 + $0x198] sm:$0xff]
  %v66 = vld [vmem:[%s0 + $0x1a0] sm:$0xff]
  %v67 = vld [vmem:[%s0 + $0x1a8] sm:$0xff]
  %v68 = vld [vmem:[%s0 + $0x1b0] sm:$0xff]
  %v69 = vld [vmem:[%s0 + $0x1b8] sm:$0xff]
  %v70 = vld [vmem:[%s0 + $0x1c0] sm:$0xff]
  %v71 = vld [vmem:[%s0 + $0x1c8] sm:$0xff]
  %v72 = vld [vmem:[%s0 + $0x1d0] sm:$0xff]
  %v73 = vld [vmem:[%s0 + $0x1d8] sm:$0xff]
  %v74 = vld [vmem:[%s0 + $0x1e0] sm:$0xf]
  %v75 = vld [vmem:[%s0 + $0x1e8] sm:$0xf]
  %v76 = vld [vmem:[%s2] sm:$0xff]
  %v77 = vld [vmem:[%s2 + $0x8] sm:$0xff]
  %v78 = vld [vmem:[%s2 + $0x10] sm:$0xff]
  %v79 = vld [vmem:[%s2 + $0x18] sm:$0xff]
  %v80 = vld [vmem:[%s2 + $0x20] sm:$0xff]
  %v81 = vld [vmem:[%s2 + $0x28] sm:$0xff]
  %v82 = vld [vmem:[%s2 + $0x30] sm:$0xff]
  %v83 = vld [vmem:[%s2 + $0x38] sm:$0xff]
  %v84 = vld [vmem:[%s2 + $0x40] sm:$0xff]
  %v85 = vld [vmem:[%s2 + $0x48] sm:$0xff]
  %v86 = vld [vmem:[%s2 + $0x50] sm:$0xff]
  %v87 = vld [vmem:[%s2 + $0x58] sm:$0xff]
  %v88 = vld [vmem:[%s2 + $0x60] sm:$0xff]
  %v89 = vld [vmem:[%s2 + $0x68] sm:$0xff]
  %v90 = vld [vmem:[%s2 + $0x70] sm:$0xff]
  %v91 = vld [vmem:[%s2 + $0x78] sm:$0xff]
  %v92 = vld [vmem:[%s2 + $0x80] sm:$0xff]
  %v93 = vld [vmem:[%s2 + $0x88] sm:$0xff]
  %v94 = vld [vmem:[%s2 + $0x90] sm:$0xff]
  %v95 = vld [vmem:[%s2 + $0x98] sm:$0xff]
  %v96 = vld [vmem:[%s2 + $0xa0] sm:$0xff]
  %v97 = vld [vmem:[%s2 + $0xa8] sm:$0xff]
  %v98 = vld [vmem:[%s2 + $0xb0] sm:$0xff]
  %v99 = vld [vmem:[%s2 + $0xb8] sm:$0xff]
  %v100 = vld [vmem:[%s2 + $0xc0] sm:$0xff]
  %v101 = vld [vmem:[%s2 + $0xc8] sm:$0xff]
  %v102 = vld [vmem:[%s2 + $0xd0] sm:$0xff]
  %v103 = vld [vmem:[%s2 + $0xd8] sm:$0xff]
  %v104 = vld [vmem:[%s2 + $0xe0] sm:$0xff]
  %v105 = vld [vmem:[%s2 + $0xe8] sm:$0xff]
  %v106 = vld [vmem:[%s2 + $0xf0] sm:$0xf]
  %vm107 = vcmask 556032
  %v108 = vsel %vm107, %v15, 0.0
  %v109 = vadd.f32 %v14, %v108
  %110 = vadd.xlane.f32.xlu0 %v109
  %v111 = vpop.xlane.xlu0 %110
  %v112 = vsel %vm107, %v17, 0.0
  %v113 = vadd.f32 %v16, %v112
  %114 = vadd.xlane.f32.xlu0 %v113
  %v115 = vpop.xlane.xlu0 %114
  %v116 = vsel %vm107, %v19, 0.0
  %v117 = vadd.f32 %v18, %v116
  %118 = vadd.xlane.f32.xlu0 %v117
  %v119 = vpop.xlane.xlu0 %118
  %v120 = vsel %vm107, %v21, 0.0
  %v121 = vadd.f32 %v20, %v120
  %122 = vadd.xlane.f32.xlu0 %v121
  %v123 = vpop.xlane.xlu0 %122
  %v124 = vsel %vm107, %v23, 0.0
  %v125 = vadd.f32 %v22, %v124
  %126 = vadd.xlane.f32.xlu0 %v125
  %v127 = vpop.xlane.xlu0 %126
  %v128 = vsel %vm107, %v25, 0.0
  %v129 = vadd.f32 %v24, %v128
  %130 = vadd.xlane.f32.xlu0 %v129
  %v131 = vpop.xlane.xlu0 %130
  %v132 = vsel %vm107, %v27, 0.0
  %v133 = vadd.f32 %v26, %v132
  %134 = vadd.xlane.f32.xlu0 %v133
  %v135 = vpop.xlane.xlu0 %134
  %v136 = vsel %vm107, %v29, 0.0
  %v137 = vadd.f32 %v28, %v136
  %138 = vadd.xlane.f32.xlu0 %v137
  %v139 = vpop.xlane.xlu0 %138
  %v140 = vsel %vm107, %v31, 0.0
  %v141 = vadd.f32 %v30, %v140
  %142 = vadd.xlane.f32.xlu0 %v141
  %v143 = vpop.xlane.xlu0 %142
  %v144 = vsel %vm107, %v33, 0.0
  %v145 = vadd.f32 %v32, %v144
  %146 = vadd.xlane.f32.xlu0 %v145
  %v147 = vpop.xlane.xlu0 %146
  %v148 = vsel %vm107, %v35, 0.0
  %v149 = vadd.f32 %v34, %v148
  %150 = vadd.xlane.f32.xlu0 %v149
  %v151 = vpop.xlane.xlu0 %150
  %v152 = vsel %vm107, %v37, 0.0
  %v153 = vadd.f32 %v36, %v152
  %154 = vadd.xlane.f32.xlu0 %v153
  %v155 = vpop.xlane.xlu0 %154
  %v156 = vsel %vm107, %v39, 0.0
  %v157 = vadd.f32 %v38, %v156
  %158 = vadd.xlane.f32.xlu0 %v157
  %v159 = vpop.xlane.xlu0 %158
  %v160 = vsel %vm107, %v41, 0.0
  %v161 = vadd.f32 %v40, %v160
  %162 = vadd.xlane.f32.xlu0 %v161
  %v163 = vpop.xlane.xlu0 %162
  %v164 = vsel %vm107, %v43, 0.0
  %v165 = vadd.f32 %v42, %v164
  %166 = vadd.xlane.f32.xlu0 %v165
  %v167 = vpop.xlane.xlu0 %166
  %v168 = vsel %vm107, %v45, 0.0
  %v169 = vadd.f32 %v44, %v168
  %170 = vadd.xlane.f32.xlu0 %v169
  %v171 = vpop.xlane.xlu0 %170
  %v172 = vsel %vm107, %v47, 0.0
  %v173 = vadd.f32 %v46, %v172
  %174 = vadd.xlane.f32.xlu0 %v173
  %v175 = vpop.xlane.xlu0 %174
  %v176 = vsel %vm107, %v49, 0.0
  %v177 = vadd.f32 %v48, %v176
  %178 = vadd.xlane.f32.xlu0 %v177
  %v179 = vpop.xlane.xlu0 %178
  %v180 = vsel %vm107, %v51, 0.0
  %v181 = vadd.f32 %v50, %v180
  %182 = vadd.xlane.f32.xlu0 %v181
  %v183 = vpop.xlane.xlu0 %182
  %v184 = vsel %vm107, %v53, 0.0
  %v185 = vadd.f32 %v52, %v184
  %186 = vadd.xlane.f32.xlu0 %v185
  %v187 = vpop.xlane.xlu0 %186
  %v188 = vsel %vm107, %v55, 0.0
  %v189 = vadd.f32 %v54, %v188
  %190 = vadd.xlane.f32.xlu0 %v189
  %v191 = vpop.xlane.xlu0 %190
  %v192 = vsel %vm107, %v57, 0.0
  %v193 = vadd.f32 %v56, %v192
  %194 = vadd.xlane.f32.xlu0 %v193
  %v195 = vpop.xlane.xlu0 %194
  %v196 = vsel %vm107, %v59, 0.0
  %v197 = vadd.f32 %v58, %v196
  %198 = vadd.xlane.f32.xlu0 %v197
  %v199 = vpop.xlane.xlu0 %198
  %v200 = vsel %vm107, %v61, 0.0
  %v201 = vadd.f32 %v60, %v200
  %202 = vadd.xlane.f32.xlu0 %v201
  %v203 = vpop.xlane.xlu0 %202
  %v204 = vsel %vm107, %v63, 0.0
  %v205 = vadd.f32 %v62, %v204
  %206 = vadd.xlane.f32.xlu0 %v205
  %v207 = vpop.xlane.xlu0 %206
  %v208 = vsel %vm107, %v65, 0.0
  %v209 = vadd.f32 %v64, %v208
  %210 = vadd.xlane.f32.xlu0 %v209
  %v211 = vpop.xlane.xlu0 %210
  %v212 = vsel %vm107, %v67, 0.0
  %v213 = vadd.f32 %v66, %v212
  %214 = vadd.xlane.f32.xlu0 %v213
  %v215 = vpop.xlane.xlu0 %214
  %v216 = vsel %vm107, %v69, 0.0
  %v217 = vadd.f32 %v68, %v216
  %218 = vadd.xlane.f32.xlu0 %v217
  %v219 = vpop.xlane.xlu0 %218
  %v220 = vsel %vm107, %v71, 0.0
  %v221 = vadd.f32 %v70, %v220
  %222 = vadd.xlane.f32.xlu0 %v221
  %v223 = vpop.xlane.xlu0 %222
  %v224 = vsel %vm107, %v73, 0.0
  %v225 = vadd.f32 %v72, %v224
  %226 = vadd.xlane.f32.xlu0 %v225
  %v227 = vpop.xlane.xlu0 %226
  %vm228 = vcmask 1043456
  %v229 = vsel %vm228, %v74, 0.0
  %vm230 = vcmask 551936
  %v231 = vsel %vm230, %v75, 0.0
  %v232 = vadd.f32 %v229, %v231
  %233 = vadd.xlane.f32.xlu0 %v232
  %v234 = vpop.xlane.xlu0 %233
  %v235 = vmul.f32 %v111, 0.0051020407
  %v236 = vmul.f32 %v115, 0.0051020407
  %v237 = vmul.f32 %v119, 0.0051020407
  %v238 = vmul.f32 %v123, 0.0051020407
  %v239 = vmul.f32 %v127, 0.0051020407
  %v240 = vmul.f32 %v131, 0.0051020407
  %v241 = vmul.f32 %v135, 0.0051020407
  %v242 = vmul.f32 %v139, 0.0051020407
  %v243 = vmul.f32 %v143, 0.0051020407
  %v244 = vmul.f32 %v147, 0.0051020407
  %v245 = vmul.f32 %v151, 0.0051020407
  %v246 = vmul.f32 %v155, 0.0051020407
  %v247 = vmul.f32 %v159, 0.0051020407
  %v248 = vmul.f32 %v163, 0.0051020407
  %v249 = vmul.f32 %v167, 0.0051020407
  %v250 = vmul.f32 %v171, 0.0051020407
  %v251 = vmul.f32 %v175, 0.0051020407
  %v252 = vmul.f32 %v179, 0.0051020407
  %v253 = vmul.f32 %v183, 0.0051020407
  %v254 = vmul.f32 %v187, 0.0051020407
  %v255 = vmul.f32 %v191, 0.0051020407
  %v256 = vmul.f32 %v195, 0.0051020407
  %v257 = vmul.f32 %v199, 0.0051020407
  %v258 = vmul.f32 %v203, 0.0051020407
  %v259 = vmul.f32 %v207, 0.0051020407
  %v260 = vmul.f32 %v211, 0.0051020407
  %v261 = vmul.f32 %v215, 0.0051020407
  %v262 = vmul.f32 %v219, 0.0051020407
  %v263 = vmul.f32 %v223, 0.0051020407
  %v264 = vmul.f32 %v227, 0.0051020407
  %v265 = vmul.f32 %v234, 0.0051020407
  %v266 = vmul.f32 %v14, %v14
  %v267 = vmul.f32 %v15, %v15
  %v268 = vmul.f32 %v16, %v16
  %v269 = vmul.f32 %v17, %v17
  %v270 = vmul.f32 %v18, %v18
  %v271 = vmul.f32 %v19, %v19
  %v272 = vmul.f32 %v20, %v20
  %v273 = vmul.f32 %v21, %v21
  %v274 = vmul.f32 %v22, %v22
  %v275 = vmul.f32 %v23, %v23
  %v276 = vmul.f32 %v24, %v24
  %v277 = vmul.f32 %v25, %v25
  %v278 = vmul.f32 %v26, %v26
  %v279 = vmul.f32 %v27, %v27
  %v280 = vmul.f32 %v28, %v28
  %v281 = vmul.f32 %v29, %v29
  %v282 = vmul.f32 %v30, %v30
  %v283 = vmul.f32 %v31, %v31
  %v284 = vmul.f32 %v32, %v32
  %v285 = vmul.f32 %v33, %v33
  %v286 = vmul.f32 %v34, %v34
  %v287 = vmul.f32 %v35, %v35
  %v288 = vmul.f32 %v36, %v36
  %v289 = vmul.f32 %v37, %v37
  %v290 = vmul.f32 %v38, %v38
  %v291 = vmul.f32 %v39, %v39
  %v292 = vmul.f32 %v40, %v40
  %v293 = vmul.f32 %v41, %v41
  %v294 = vmul.f32 %v42, %v42
  %v295 = vmul.f32 %v43, %v43
  %v296 = vmul.f32 %v44, %v44
  %v297 = vmul.f32 %v45, %v45
  %v298 = vmul.f32 %v46, %v46
  %v299 = vmul.f32 %v47, %v47
  %v300 = vmul.f32 %v48, %v48
  %v301 = vmul.f32 %v49, %v49
  %v302 = vmul.f32 %v50, %v50
  %v303 = vmul.f32 %v51, %v51
  %v304 = vmul.f32 %v52, %v52
  %v305 = vmul.f32 %v53, %v53
  %v306 = vmul.f32 %v54, %v54
  %v307 = vmul.f32 %v55, %v55
  %v308 = vmul.f32 %v56, %v56
  %v309 = vmul.f32 %v57, %v57
  %v310 = vmul.f32 %v58, %v58
  %v311 = vmul.f32 %v59, %v59
  %v312 = vmul.f32 %v60, %v60
  %v313 = vmul.f32 %v61, %v61
  %v314 = vmul.f32 %v62, %v62
  %v315 = vmul.f32 %v63, %v63
  %v316 = vmul.f32 %v64, %v64
  %v317 = vmul.f32 %v65, %v65
  %v318 = vmul.f32 %v66, %v66
  %v319 = vmul.f32 %v67, %v67
  %v320 = vmul.f32 %v68, %v68
  %v321 = vmul.f32 %v69, %v69
  %v322 = vmul.f32 %v70, %v70
  %v323 = vmul.f32 %v71, %v71
  %v324 = vmul.f32 %v72, %v72
  %v325 = vmul.f32 %v73, %v73
  %v326 = vmul.f32 %v74, %v74
  %v327 = vmul.f32 %v75, %v75
  %v328 = vsel %vm107, %v267, 0.0
  %v329 = vadd.f32 %v266, %v328
  %330 = vadd.xlane.f32.xlu0 %v329
  %v331 = vpop.xlane.xlu0 %330
  %v332 = vsel %vm107, %v269, 0.0
  %v333 = vadd.f32 %v268, %v332
  %334 = vadd.xlane.f32.xlu0 %v333
  %v335 = vpop.xlane.xlu0 %334
  %v336 = vsel %vm107, %v271, 0.0
  %v337 = vadd.f32 %v270, %v336
  %338 = vadd.xlane.f32.xlu0 %v337
  %v339 = vpop.xlane.xlu0 %338
  %v340 = vsel %vm107, %v273, 0.0
  %v341 = vadd.f32 %v272, %v340
  %342 = vadd.xlane.f32.xlu0 %v341
  %v343 = vpop.xlane.xlu0 %342
  %v344 = vsel %vm107, %v275, 0.0
  %v345 = vadd.f32 %v274, %v344
  %346 = vadd.xlane.f32.xlu0 %v345
  %v347 = vpop.xlane.xlu0 %346
  %v348 = vsel %vm107, %v277, 0.0
  %v349 = vadd.f32 %v276, %v348
  %350 = vadd.xlane.f32.xlu0 %v349
  %v351 = vpop.xlane.xlu0 %350
  %v352 = vsel %vm107, %v279, 0.0
  %v353 = vadd.f32 %v278, %v352
  %354 = vadd.xlane.f32.xlu0 %v353
  %v355 = vpop.xlane.xlu0 %354
  %v356 = vsel %vm107, %v281, 0.0
  %v357 = vadd.f32 %v280, %v356
  %358 = vadd.xlane.f32.xlu0 %v357
  %v359 = vpop.xlane.xlu0 %358
  %v360 = vsel %vm107, %v283, 0.0
  %v361 = vadd.f32 %v282, %v360
  %362 = vadd.xlane.f32.xlu0 %v361
  %v363 = vpop.xlane.xlu0 %362
  %v364 = vsel %vm107, %v285, 0.0
  %v365 = vadd.f32 %v284, %v364
  %366 = vadd.xlane.f32.xlu0 %v365
  %v367 = vpop.xlane.xlu0 %366
  %v368 = vsel %vm107, %v287, 0.0
  %v369 = vadd.f32 %v286, %v368
  %370 = vadd.xlane.f32.xlu0 %v369
  %v371 = vpop.xlane.xlu0 %370
  %v372 = vsel %vm107, %v289, 0.0
  %v373 = vadd.f32 %v288, %v372
  %374 = vadd.xlane.f32.xlu0 %v373
  %v375 = vpop.xlane.xlu0 %374
  %v376 = vsel %vm107, %v291, 0.0
  %v377 = vadd.f32 %v290, %v376
  %378 = vadd.xlane.f32.xlu0 %v377
  %v379 = vpop.xlane.xlu0 %378
  %v380 = vsel %vm107, %v293, 0.0
  %v381 = vadd.f32 %v292, %v380
  %382 = vadd.xlane.f32.xlu0 %v381
  %v383 = vpop.xlane.xlu0 %382
  %v384 = vsel %vm107, %v295, 0.0
  %v385 = vadd.f32 %v294, %v384
  %386 = vadd.xlane.f32.xlu0 %v385
  %v387 = vpop.xlane.xlu0 %386
  %v388 = vsel %vm107, %v297, 0.0
  %v389 = vadd.f32 %v296, %v388
  %390 = vadd.xlane.f32.xlu0 %v389
  %v391 = vpop.xlane.xlu0 %390
  %v392 = vsel %vm107, %v299, 0.0
  %v393 = vadd.f32 %v298, %v392
  %394 = vadd.xlane.f32.xlu0 %v393
  %v395 = vpop.xlane.xlu0 %394
  %v396 = vsel %vm107, %v301, 0.0
  %v397 = vadd.f32 %v300, %v396
  %398 = vadd.xlane.f32.xlu0 %v397
  %v399 = vpop.xlane.xlu0 %398
  %v400 = vsel %vm107, %v303, 0.0
  %v401 = vadd.f32 %v302, %v400
  %402 = vadd.xlane.f32.xlu0 %v401
  %v403 = vpop.xlane.xlu0 %402
  %v404 = vsel %vm107, %v305, 0.0
  %v405 = vadd.f32 %v304, %v404
  %406 = vadd.xlane.f32.xlu0 %v405
  %v407 = vpop.xlane.xlu0 %406
  %v408 = vsel %vm107, %v307, 0.0
  %v409 = vadd.f32 %v306, %v408
  %410 = vadd.xlane.f32.xlu0 %v409
  %v411 = vpop.xlane.xlu0 %410
  %v412 = vsel %vm107, %v309, 0.0
  %v413 = vadd.f32 %v308, %v412
  %414 = vadd.xlane.f32.xlu0 %v413
  %v415 = vpop.xlane.xlu0 %414
  %v416 = vsel %vm107, %v311, 0.0
  %v417 = vadd.f32 %v310, %v416
  %418 = vadd.xlane.f32.xlu0 %v417
  %v419 = vpop.xlane.xlu0 %418
  %v420 = vsel %vm107, %v313, 0.0
  %v421 = vadd.f32 %v312, %v420
  %422 = vadd.xlane.f32.xlu0 %v421
  %v423 = vpop.xlane.xlu0 %422
  %v424 = vsel %vm107, %v315, 0.0
  %v425 = vadd.f32 %v314, %v424
  %426 = vadd.xlane.f32.xlu0 %v425
  %v427 = vpop.xlane.xlu0 %426
  %v428 = vsel %vm107, %v317, 0.0
  %v429 = vadd.f32 %v316, %v428
  %430 = vadd.xlane.f32.xlu0 %v429
  %v431 = vpop.xlane.xlu0 %430
  %v432 = vsel %vm107, %v319, 0.0
  %v433 = vadd.f32 %v318, %v432
  %434 = vadd.xlane.f32.xlu0 %v433
  %v435 = vpop.xlane.xlu0 %434
  %v436 = vsel %vm107, %v321, 0.0
  %v437 = vadd.f32 %v320, %v436
  %438 = vadd.xlane.f32.xlu0 %v437
  %v439 = vpop.xlane.xlu0 %438
  %v440 = vsel %vm107, %v323, 0.0
  %v441 = vadd.f32 %v322, %v440
  %442 = vadd.xlane.f32.xlu0 %v441
  %v443 = vpop.xlane.xlu0 %442
  %v444 = vsel %vm107, %v325, 0.0
  %v445 = vadd.f32 %v324, %v444
  %446 = vadd.xlane.f32.xlu0 %v445
  %v447 = vpop.xlane.xlu0 %446
  %v448 = vsel %vm228, %v326, 0.0
  %v449 = vsel %vm230, %v327, 0.0
  %v450 = vadd.f32 %v448, %v449
  %451 = vadd.xlane.f32.xlu0 %v450
  %v452 = vpop.xlane.xlu0 %451
  %v453 = vmul.f32 %v331, 0.0051020407
  %v454 = vmul.f32 %v335, 0.0051020407
  %v455 = vmul.f32 %v339, 0.0051020407
  %v456 = vmul.f32 %v343, 0.0051020407
  %v457 = vmul.f32 %v347, 0.0051020407
  %v458 = vmul.f32 %v351, 0.0051020407
  %v459 = vmul.f32 %v355, 0.0051020407
  %v460 = vmul.f32 %v359, 0.0051020407
  %v461 = vmul.f32 %v363, 0.0051020407
  %v462 = vmul.f32 %v367, 0.0051020407
  %v463 = vmul.f32 %v371, 0.0051020407
  %v464 = vmul.f32 %v375, 0.0051020407
  %v465 = vmul.f32 %v379, 0.0051020407
  %v466 = vmul.f32 %v383, 0.0051020407
  %v467 = vmul.f32 %v387, 0.0051020407
  %v468 = vmul.f32 %v391, 0.0051020407
  %v469 = vmul.f32 %v395, 0.0051020407
  %v470 = vmul.f32 %v399, 0.0051020407
  %v471 = vmul.f32 %v403, 0.0051020407
  %v472 = vmul.f32 %v407, 0.0051020407
  %v473 = vmul.f32 %v411, 0.0051020407
  %v474 = vmul.f32 %v415, 0.0051020407
  %v475 = vmul.f32 %v419, 0.0051020407
  %v476 = vmul.f32 %v423, 0.0051020407
  %v477 = vmul.f32 %v427, 0.0051020407
  %v478 = vmul.f32 %v431, 0.0051020407
  %v479 = vmul.f32 %v435, 0.0051020407
  %v480 = vmul.f32 %v439, 0.0051020407
  %v481 = vmul.f32 %v443, 0.0051020407
  %v482 = vmul.f32 %v447, 0.0051020407
  %v483 = vmul.f32 %v452, 0.0051020407
  %v484 = vmul.f32 %v235, %v235
  %v485 = vmul.f32 %v236, %v236
  %v486 = vmul.f32 %v237, %v237
  %v487 = vmul.f32 %v238, %v238
  %v488 = vmul.f32 %v239, %v239
  %v489 = vmul.f32 %v240, %v240
  %v490 = vmul.f32 %v241, %v241
  %v491 = vmul.f32 %v242, %v242
  %v492 = vmul.f32 %v243, %v243
  %v493 = vmul.f32 %v244, %v244
  %v494 = vmul.f32 %v245, %v245
  %v495 = vmul.f32 %v246, %v246
  %v496 = vmul.f32 %v247, %v247
  %v497 = vmul.f32 %v248, %v248
  %v498 = vmul.f32 %v249, %v249
  %v499 = vmul.f32 %v250, %v250
  %v500 = vmul.f32 %v251, %v251
  %v501 = vmul.f32 %v252, %v252
  %v502 = vmul.f32 %v253, %v253
  %v503 = vmul.f32 %v254, %v254
  %v504 = vmul.f32 %v255, %v255
  %v505 = vmul.f32 %v256, %v256
  %v506 = vmul.f32 %v257, %v257
  %v507 = vmul.f32 %v258, %v258
  %v508 = vmul.f32 %v259, %v259
  %v509 = vmul.f32 %v260, %v260
  %v510 = vmul.f32 %v261, %v261
  %v511 = vmul.f32 %v262, %v262
  %v512 = vmul.f32 %v263, %v263
  %v513 = vmul.f32 %v264, %v264
  %v514 = vmul.f32 %v265, %v265
  %v515 = vsub.f32 %v453, %v484
  %v516 = vsub.f32 %v454, %v485
  %v517 = vsub.f32 %v455, %v486
  %v518 = vsub.f32 %v456, %v487
  %v519 = vsub.f32 %v457, %v488
  %v520 = vsub.f32 %v458, %v489
  %v521 = vsub.f32 %v459, %v490
  %v522 = vsub.f32 %v460, %v491
  %v523 = vsub.f32 %v461, %v492
  %v524 = vsub.f32 %v462, %v493
  %v525 = vsub.f32 %v463, %v494
  %v526 = vsub.f32 %v464, %v495
  %v527 = vsub.f32 %v465, %v496
  %v528 = vsub.f32 %v466, %v497
  %v529 = vsub.f32 %v467, %v498
  %v530 = vsub.f32 %v468, %v499
  %v531 = vsub.f32 %v469, %v500
  %v532 = vsub.f32 %v470, %v501
  %v533 = vsub.f32 %v471, %v502
  %v534 = vsub.f32 %v472, %v503
  %v535 = vsub.f32 %v473, %v504
  %v536 = vsub.f32 %v474, %v505
  %v537 = vsub.f32 %v475, %v506
  %v538 = vsub.f32 %v476, %v507
  %v539 = vsub.f32 %v477, %v508
  %v540 = vsub.f32 %v478, %v509
  %v541 = vsub.f32 %v479, %v510
  %v542 = vsub.f32 %v480, %v511
  %v543 = vsub.f32 %v481, %v512
  %v544 = vsub.f32 %v482, %v513
  %v545 = vsub.f32 %v483, %v514
  %v546 = vmax.f32 %v515, 0.0
  %v547 = vmax.f32 %v516, 0.0
  %v548 = vmax.f32 %v517, 0.0
  %v549 = vmax.f32 %v518, 0.0
  %v550 = vmax.f32 %v519, 0.0
  %v551 = vmax.f32 %v520, 0.0
  %v552 = vmax.f32 %v521, 0.0
  %v553 = vmax.f32 %v522, 0.0
  %v554 = vmax.f32 %v523, 0.0
  %v555 = vmax.f32 %v524, 0.0
  %v556 = vmax.f32 %v525, 0.0
  %v557 = vmax.f32 %v526, 0.0
  %v558 = vmax.f32 %v527, 0.0
  %v559 = vmax.f32 %v528, 0.0
  %v560 = vmax.f32 %v529, 0.0
  %v561 = vmax.f32 %v530, 0.0
  %v562 = vmax.f32 %v531, 0.0
  %v563 = vmax.f32 %v532, 0.0
  %v564 = vmax.f32 %v533, 0.0
  %v565 = vmax.f32 %v534, 0.0
  %v566 = vmax.f32 %v535, 0.0
  %v567 = vmax.f32 %v536, 0.0
  %v568 = vmax.f32 %v537, 0.0
  %v569 = vmax.f32 %v538, 0.0
  %v570 = vmax.f32 %v539, 0.0
  %v571 = vmax.f32 %v540, 0.0
  %v572 = vmax.f32 %v541, 0.0
  %v573 = vmax.f32 %v542, 0.0
  %v574 = vmax.f32 %v543, 0.0
  %v575 = vmax.f32 %v544, 0.0
  %v576 = vmax.f32 %v545, 0.0
  %v577 = vadd.f32 %v546, 1e-05
  %v578 = vadd.f32 %v547, 1e-05
  %v579 = vadd.f32 %v548, 1e-05
  %v580 = vadd.f32 %v549, 1e-05
  %v581 = vadd.f32 %v550, 1e-05
  %v582 = vadd.f32 %v551, 1e-05
  %v583 = vadd.f32 %v552, 1e-05
  %v584 = vadd.f32 %v553, 1e-05
  %v585 = vadd.f32 %v554, 1e-05
  %v586 = vadd.f32 %v555, 1e-05
  %v587 = vadd.f32 %v556, 1e-05
  %v588 = vadd.f32 %v557, 1e-05
  %v589 = vadd.f32 %v558, 1e-05
  %v590 = vadd.f32 %v559, 1e-05
  %v591 = vadd.f32 %v560, 1e-05
  %v592 = vadd.f32 %v561, 1e-05
  %v593 = vadd.f32 %v562, 1e-05
  %v594 = vadd.f32 %v563, 1e-05
  %v595 = vadd.f32 %v564, 1e-05
  %v596 = vadd.f32 %v565, 1e-05
  %v597 = vadd.f32 %v566, 1e-05
  %v598 = vadd.f32 %v567, 1e-05
  %v599 = vadd.f32 %v568, 1e-05
  %v600 = vadd.f32 %v569, 1e-05
  %v601 = vadd.f32 %v570, 1e-05
  %v602 = vadd.f32 %v571, 1e-05
  %v603 = vadd.f32 %v572, 1e-05
  %v604 = vadd.f32 %v573, 1e-05
  %v605 = vadd.f32 %v574, 1e-05
  %v606 = vadd.f32 %v575, 1e-05
  %v607 = vadd.f32 %v576, 1e-05
  %v608 = vrsqrt.pop %v577
  %v609 = vrsqrt.pop %v578
  %v610 = vrsqrt.pop %v579
  %v611 = vrsqrt.pop %v580
  %v612 = vrsqrt.pop %v581
  %v613 = vrsqrt.pop %v582
  %v614 = vrsqrt.pop %v583
  %v615 = vrsqrt.pop %v584
  %v616 = vrsqrt.pop %v585
  %v617 = vrsqrt.pop %v586
  %v618 = vrsqrt.pop %v587
  %v619 = vrsqrt.pop %v588
  %v620 = vrsqrt.pop %v589
  %v621 = vrsqrt.pop %v590
  %v622 = vrsqrt.pop %v591
  %v623 = vrsqrt.pop %v592
  %v624 = vrsqrt.pop %v593
  %v625 = vrsqrt.pop %v594
  %v626 = vrsqrt.pop %v595
  %v627 = vrsqrt.pop %v596
  %v628 = vrsqrt.pop %v597
  %v629 = vrsqrt.pop %v598
  %v630 = vrsqrt.pop %v599
  %v631 = vrsqrt.pop %v600
  %v632 = vrsqrt.pop %v601
  %v633 = vrsqrt.pop %v602
  %v634 = vrsqrt.pop %v603
  %v635 = vrsqrt.pop %v604
  %v636 = vrsqrt.pop %v605
  %v637 = vrsqrt.pop %v606
  %v638 = vrsqrt.pop %v607
  %v639 = vmul.f32 %v76, %v608
  %v640 = vmul.f32 %v77, %v609
  %v641 = vmul.f32 %v78, %v610
  %v642 = vmul.f32 %v79, %v611
  %v643 = vmul.f32 %v80, %v612
  %v644 = vmul.f32 %v81, %v613
  %v645 = vmul.f32 %v82, %v614
  %v646 = vmul.f32 %v83, %v615
  %v647 = vmul.f32 %v84, %v616
  %v648 = vmul.f32 %v85, %v617
  %v649 = vmul.f32 %v86, %v618
  %v650 = vmul.f32 %v87, %v619
  %v651 = vmul.f32 %v88, %v620
  %v652 = vmul.f32 %v89, %v621
  %v653 = vmul.f32 %v90, %v622
  %v654 = vmul.f32 %v91, %v623
  %v655 = vmul.f32 %v92, %v624
  %v656 = vmul.f32 %v93, %v625
  %v657 = vmul.f32 %v94, %v626
  %v658 = vmul.f32 %v95, %v627
  %v659 = vmul.f32 %v96, %v628
  %v660 = vmul.f32 %v97, %v629
  %v661 = vmul.f32 %v98, %v630
  %v662 = vmul.f32 %v99, %v631
  %v663 = vmul.f32 %v100, %v632
  %v664 = vmul.f32 %v101, %v633
  %v665 = vmul.f32 %v102, %v634
  %v666 = vmul.f32 %v103, %v635
  %v667 = vmul.f32 %v104, %v636
  %v668 = vmul.f32 %v105, %v637
  %v669 = vmul.f32 %v106, %v638
  %v670 = vmul.f32 %v235, %v639
  %v671 = vmul.f32 %v236, %v640
  %v672 = vmul.f32 %v237, %v641
  %v673 = vmul.f32 %v238, %v642
  %v674 = vmul.f32 %v239, %v643
  %v675 = vmul.f32 %v240, %v644
  %v676 = vmul.f32 %v241, %v645
  %v677 = vmul.f32 %v242, %v646
  %v678 = vmul.f32 %v243, %v647
  %v679 = vmul.f32 %v244, %v648
  %v680 = vmul.f32 %v245, %v649
  %v681 = vmul.f32 %v246, %v650
  %v682 = vmul.f32 %v247, %v651
  %v683 = vmul.f32 %v248, %v652
  %v684 = vmul.f32 %v249, %v653
  %v685 = vmul.f32 %v250, %v654
  %v686 = vmul.f32 %v251, %v655
  %v687 = vmul.f32 %v252, %v656
  %v688 = vmul.f32 %v253, %v657
  %v689 = vmul.f32 %v254, %v658
  %v690 = vmul.f32 %v255, %v659
  %v691 = vmul.f32 %v256, %v660
  %v692 = vmul.f32 %v257, %v661
  %v693 = vmul.f32 %v258, %v662
  %v694 = vmul.f32 %v259, %v663
  %v695 = vmul.f32 %v260, %v664
  %v696 = vmul.f32 %v261, %v665
  %v697 = vmul.f32 %v262, %v666
  %v698 = vmul.f32 %v263, %v667
  %v699 = vmul.f32 %v264, %v668
  %v700 = vmul.f32 %v265, %v669
  %732 = vrot.lane.b32.xlu0 %v670, 1
  %v733 = vpop.permute.xlu0 %732
  %734 = vrot.lane.b32.xlu0 %v671, 1
  %v735 = vpop.permute.xlu0 %734
  %736 = vrot.lane.b32.xlu0 %v672, 1
  %v737 = vpop.permute.xlu0 %736
  %738 = vrot.lane.b32.xlu0 %v673, 1
  %v739 = vpop.permute.xlu0 %738
  %740 = vrot.lane.b32.xlu0 %v674, 1
  %v741 = vpop.permute.xlu0 %740
  %742 = vrot.lane.b32.xlu0 %v675, 1
  %v743 = vpop.permute.xlu0 %742
  %744 = vrot.lane.b32.xlu0 %v676, 1
  %v745 = vpop.permute.xlu0 %744
  %746 = vrot.lane.b32.xlu0 %v677, 1
  %v747 = vpop.permute.xlu0 %746
  %748 = vrot.lane.b32.xlu0 %v678, 1
  %v749 = vpop.permute.xlu0 %748
  %750 = vrot.lane.b32.xlu0 %v679, 1
  %v751 = vpop.permute.xlu0 %750
  %752 = vrot.lane.b32.xlu0 %v680, 1
  %v753 = vpop.permute.xlu0 %752
  %754 = vrot.lane.b32.xlu0 %v681, 1
  %v755 = vpop.permute.xlu0 %754
  %756 = vrot.lane.b32.xlu0 %v682, 1
  %v757 = vpop.permute.xlu0 %756
  %758 = vrot.lane.b32.xlu0 %v683, 1
  %v759 = vpop.permute.xlu0 %758
  %760 = vrot.lane.b32.xlu0 %v684, 1
  %v761 = vpop.permute.xlu0 %760
  %762 = vrot.lane.b32.xlu0 %v685, 1
  %v763 = vpop.permute.xlu0 %762
  %764 = vrot.lane.b32.xlu0 %v686, 1
  %v765 = vpop.permute.xlu0 %764
  %766 = vrot.lane.b32.xlu0 %v687, 1
  %v767 = vpop.permute.xlu0 %766
  %768 = vrot.lane.b32.xlu0 %v688, 1
  %v769 = vpop.permute.xlu0 %768
  %770 = vrot.lane.b32.xlu0 %v689, 1
  %v771 = vpop.permute.xlu0 %770
  %772 = vrot.lane.b32.xlu0 %v690, 1
  %v773 = vpop.permute.xlu0 %772
  %774 = vrot.lane.b32.xlu0 %v691, 1
  %v775 = vpop.permute.xlu0 %774
  %776 = vrot.lane.b32.xlu0 %v692, 1
  %v777 = vpop.permute.xlu0 %776
  %778 = vrot.lane.b32.xlu0 %v693, 1
  %v779 = vpop.permute.xlu0 %778
  %780 = vrot.lane.b32.xlu0 %v694, 1
  %v781 = vpop.permute.xlu0 %780
  %782 = vrot.lane.b32.xlu0 %v695, 1
  %v783 = vpop.permute.xlu0 %782
  %784 = vrot.lane.b32.xlu0 %v696, 1
  %v785 = vpop.permute.xlu0 %784
  %786 = vrot.lane.b32.xlu0 %v697, 1
  %v787 = vpop.permute.xlu0 %786
  %788 = vrot.lane.b32.xlu0 %v698, 1
  %v789 = vpop.permute.xlu0 %788
  %790 = vrot.lane.b32.xlu0 %v699, 1
  %v791 = vpop.permute.xlu0 %790
  %792 = vrot.lane.b32.xlu0 %v700, 1
  %v793 = vpop.permute.xlu0 %792
  %v825 = vsub.f32 %v76, %v733
  %v826 = vsub.f32 %v77, %v735
  %v827 = vsub.f32 %v78, %v737
  %v828 = vsub.f32 %v79, %v739
  %v829 = vsub.f32 %v80, %v741
  %v830 = vsub.f32 %v81, %v743
  %v831 = vsub.f32 %v82, %v745
  %v832 = vsub.f32 %v83, %v747
  %v833 = vsub.f32 %v84, %v749
  %v834 = vsub.f32 %v85, %v751
  %v835 = vsub.f32 %v86, %v753
  %v836 = vsub.f32 %v87, %v755
  %v837 = vsub.f32 %v88, %v757
  %v838 = vsub.f32 %v89, %v759
  %v839 = vsub.f32 %v90, %v761
  %v840 = vsub.f32 %v91, %v763
  %v841 = vsub.f32 %v92, %v765
  %v842 = vsub.f32 %v93, %v767
  %v843 = vsub.f32 %v94, %v769
  %v844 = vsub.f32 %v95, %v771
  %v845 = vsub.f32 %v96, %v773
  %v846 = vsub.f32 %v97, %v775
  %v847 = vsub.f32 %v98, %v777
  %v848 = vsub.f32 %v99, %v779
  %v849 = vsub.f32 %v100, %v781
  %v850 = vsub.f32 %v101, %v783
  %v851 = vsub.f32 %v102, %v785
  %v852 = vsub.f32 %v103, %v787
  %v853 = vsub.f32 %v104, %v789
  %v854 = vsub.f32 %v105, %v791
  %v855 = vsub.f32 %v106, %v793
  %857 = vset.pattern.permute.xlu0 0
  %858 = vperm.xlu0 %857, %v639
  %v859 = vpop.permute.xlu0 %858
  %862 = vset.pattern.permute.xlu0 0
  %863 = vperm.xlu0 %862, %v640
  %v864 = vpop.permute.xlu0 %863
  %867 = vset.pattern.permute.xlu0 0
  %868 = vperm.xlu0 %867, %v641
  %v869 = vpop.permute.xlu0 %868
  %872 = vset.pattern.permute.xlu0 0
  %873 = vperm.xlu0 %872, %v642
  %v874 = vpop.permute.xlu0 %873
  %877 = vset.pattern.permute.xlu0 0
  %878 = vperm.xlu0 %877, %v643
  %v879 = vpop.permute.xlu0 %878
  %882 = vset.pattern.permute.xlu0 0
  %883 = vperm.xlu0 %882, %v644
  %v884 = vpop.permute.xlu0 %883
  %887 = vset.pattern.permute.xlu0 0
  %888 = vperm.xlu0 %887, %v645
  %v889 = vpop.permute.xlu0 %888
  %892 = vset.pattern.permute.xlu0 0
  %893 = vperm.xlu0 %892, %v646
  %v894 = vpop.permute.xlu0 %893
  %897 = vset.pattern.permute.xlu0 0
  %898 = vperm.xlu0 %897, %v647
  %v899 = vpop.permute.xlu0 %898
  %902 = vset.pattern.permute.xlu0 0
  %903 = vperm.xlu0 %902, %v648
  %v904 = vpop.permute.xlu0 %903
  %907 = vset.pattern.permute.xlu0 0
  %908 = vperm.xlu0 %907, %v649
  %v909 = vpop.permute.xlu0 %908
  %912 = vset.pattern.permute.xlu0 0
  %913 = vperm.xlu0 %912, %v650
  %v914 = vpop.permute.xlu0 %913
  %917 = vset.pattern.permute.xlu0 0
  %918 = vperm.xlu0 %917, %v651
  %v919 = vpop.permute.xlu0 %918
  %922 = vset.pattern.permute.xlu0 0
  %923 = vperm.xlu0 %922, %v652
  %v924 = vpop.permute.xlu0 %923
  %927 = vset.pattern.permute.xlu0 0
  %928 = vperm.xlu0 %927, %v653
  %v929 = vpop.permute.xlu0 %928
  %932 = vset.pattern.permute.xlu0 0
  %933 = vperm.xlu0 %932, %v654
  %v934 = vpop.permute.xlu0 %933
  %937 = vset.pattern.permute.xlu0 0
  %938 = vperm.xlu0 %937, %v655
  %v939 = vpop.permute.xlu0 %938
  %942 = vset.pattern.permute.xlu0 0
  %943 = vperm.xlu0 %942, %v656
  %v944 = vpop.permute.xlu0 %943
  %947 = vset.pattern.permute.xlu0 0
  %948 = vperm.xlu0 %947, %v657
  %v949 = vpop.permute.xlu0 %948
  %952 = vset.pattern.permute.xlu0 0
  %953 = vperm.xlu0 %952, %v658
  %v954 = vpop.permute.xlu0 %953
  %957 = vset.pattern.permute.xlu0 0
  %958 = vperm.xlu0 %957, %v659
  %v959 = vpop.permute.xlu0 %958
  %962 = vset.pattern.permute.xlu0 0
  %963 = vperm.xlu0 %962, %v660
  %v964 = vpop.permute.xlu0 %963
  %967 = vset.pattern.permute.xlu0 0
  %968 = vperm.xlu0 %967, %v661
  %v969 = vpop.permute.xlu0 %968
  %972 = vset.pattern.permute.xlu0 0
  %973 = vperm.xlu0 %972, %v662
  %v974 = vpop.permute.xlu0 %973
  %977 = vset.pattern.permute.xlu0 0
  %978 = vperm.xlu0 %977, %v663
  %v979 = vpop.permute.xlu0 %978
  %982 = vset.pattern.permute.xlu0 0
  %983 = vperm.xlu0 %982, %v664
  %v984 = vpop.permute.xlu0 %983
  %987 = vset.pattern.permute.xlu0 0
  %988 = vperm.xlu0 %987, %v665
  %v989 = vpop.permute.xlu0 %988
  %992 = vset.pattern.permute.xlu0 0
  %993 = vperm.xlu0 %992, %v666
  %v994 = vpop.permute.xlu0 %993
  %997 = vset.pattern.permute.xlu0 0
  %998 = vperm.xlu0 %997, %v667
  %v999 = vpop.permute.xlu0 %998
  %1002 = vset.pattern.permute.xlu0 0
  %1003 = vperm.xlu0 %1002, %v668
  %v1004 = vpop.permute.xlu0 %1003
  %1007 = vset.pattern.permute.xlu0 0
  %1008 = vperm.xlu0 %1007, %v669
  %v1009 = vpop.permute.xlu0 %1008
  %v1011 = vmul.f32 %v14, %v859
  %v1012 = vmul.f32 %v15, %v859
  %v1013 = vmul.f32 %v16, %v864
  %v1014 = vmul.f32 %v17, %v864
  %v1015 = vmul.f32 %v18, %v869
  %v1016 = vmul.f32 %v19, %v869
  %v1017 = vmul.f32 %v20, %v874
  %v1018 = vmul.f32 %v21, %v874
  %v1019 = vmul.f32 %v22, %v879
  %v1020 = vmul.f32 %v23, %v879
  %v1021 = vmul.f32 %v24, %v884
  %v1022 = vmul.f32 %v25, %v884
  %v1023 = vmul.f32 %v26, %v889
  %v1024 = vmul.f32 %v27, %v889
  %v1025 = vmul.f32 %v28, %v894
  %v1026 = vmul.f32 %v29, %v894
  %v1027 = vmul.f32 %v30, %v899
  %v1028 = vmul.f32 %v31, %v899
  %v1029 = vmul.f32 %v32, %v904
  %v1030 = vmul.f32 %v33, %v904
  %v1031 = vmul.f32 %v34, %v909
  %v1032 = vmul.f32 %v35, %v909
  %v1033 = vmul.f32 %v36, %v914
  %v1034 = vmul.f32 %v37, %v914
  %v1035 = vmul.f32 %v38, %v919
  %v1036 = vmul.f32 %v39, %v919
  %v1037 = vmul.f32 %v40, %v924
  %v1038 = vmul.f32 %v41, %v924
  %v1039 = vmul.f32 %v42, %v929
  %v1040 = vmul.f32 %v43, %v929
  %v1041 = vmul.f32 %v44, %v934
  %v1042 = vmul.f32 %v45, %v934
  %v1043 = vmul.f32 %v46, %v939
  %v1044 = vmul.f32 %v47, %v939
  %v1045 = vmul.f32 %v48, %v944
  %v1046 = vmul.f32 %v49, %v944
  %v1047 = vmul.f32 %v50, %v949
  %v1048 = vmul.f32 %v51, %v949
  %v1049 = vmul.f32 %v52, %v954
  %v1050 = vmul.f32 %v53, %v954
  %v1051 = vmul.f32 %v54, %v959
  %v1052 = vmul.f32 %v55, %v959
  %v1053 = vmul.f32 %v56, %v964
  %v1054 = vmul.f32 %v57, %v964
  %v1055 = vmul.f32 %v58, %v969
  %v1056 = vmul.f32 %v59, %v969
  %v1057 = vmul.f32 %v60, %v974
  %v1058 = vmul.f32 %v61, %v974
  %v1059 = vmul.f32 %v62, %v979
  %v1060 = vmul.f32 %v63, %v979
  %v1061 = vmul.f32 %v64, %v984
  %v1062 = vmul.f32 %v65, %v984
  %v1063 = vmul.f32 %v66, %v989
  %v1064 = vmul.f32 %v67, %v989
  %v1065 = vmul.f32 %v68, %v994
  %v1066 = vmul.f32 %v69, %v994
  %v1067 = vmul.f32 %v70, %v999
  %v1068 = vmul.f32 %v71, %v999
  %v1069 = vmul.f32 %v72, %v1004
  %v1070 = vmul.f32 %v73, %v1004
  %v1071 = vmul.f32 %v74, %v1009
  %v1072 = vmul.f32 %v75, %v1009
  %1074 = vset.pattern.permute.xlu0 1
  %1075 = vperm.xlu0 %1074, %v825
  %v1076 = vpop.permute.xlu0 %1075
  %1079 = vset.pattern.permute.xlu0 1
  %1080 = vperm.xlu0 %1079, %v826
  %v1081 = vpop.permute.xlu0 %1080
  %1084 = vset.pattern.permute.xlu0 1
  %1085 = vperm.xlu0 %1084, %v827
  %v1086 = vpop.permute.xlu0 %1085
  %1089 = vset.pattern.permute.xlu0 1
  %1090 = vperm.xlu0 %1089, %v828
  %v1091 = vpop.permute.xlu0 %1090
  %1094 = vset.pattern.permute.xlu0 1
  %1095 = vperm.xlu0 %1094, %v829
  %v1096 = vpop.permute.xlu0 %1095
  %1099 = vset.pattern.permute.xlu0 1
  %1100 = vperm.xlu0 %1099, %v830
  %v1101 = vpop.permute.xlu0 %1100
  %1104 = vset.pattern.permute.xlu0 1
  %1105 = vperm.xlu0 %1104, %v831
  %v1106 = vpop.permute.xlu0 %1105
  %1109 = vset.pattern.permute.xlu0 1
  %1110 = vperm.xlu0 %1109, %v832
  %v1111 = vpop.permute.xlu0 %1110
  %1114 = vset.pattern.permute.xlu0 1
  %1115 = vperm.xlu0 %1114, %v833
  %v1116 = vpop.permute.xlu0 %1115
  %1119 = vset.pattern.permute.xlu0 1
  %1120 = vperm.xlu0 %1119, %v834
  %v1121 = vpop.permute.xlu0 %1120
  %1124 = vset.pattern.permute.xlu0 1
  %1125 = vperm.xlu0 %1124, %v835
  %v1126 = vpop.permute.xlu0 %1125
  %1129 = vset.pattern.permute.xlu0 1
  %1130 = vperm.xlu0 %1129, %v836
  %v1131 = vpop.permute.xlu0 %1130
  %1134 = vset.pattern.permute.xlu0 1
  %1135 = vperm.xlu0 %1134, %v837
  %v1136 = vpop.permute.xlu0 %1135
  %1139 = vset.pattern.permute.xlu0 1
  %1140 = vperm.xlu0 %1139, %v838
  %v1141 = vpop.permute.xlu0 %1140
  %1144 = vset.pattern.permute.xlu0 1
  %1145 = vperm.xlu0 %1144, %v839
  %v1146 = vpop.permute.xlu0 %1145
  %1149 = vset.pattern.permute.xlu0 1
  %1150 = vperm.xlu0 %1149, %v840
  %v1151 = vpop.permute.xlu0 %1150
  %1154 = vset.pattern.permute.xlu0 1
  %1155 = vperm.xlu0 %1154, %v841
  %v1156 = vpop.permute.xlu0 %1155
  %1159 = vset.pattern.permute.xlu0 1
  %1160 = vperm.xlu0 %1159, %v842
  %v1161 = vpop.permute.xlu0 %1160
  %1164 = vset.pattern.permute.xlu0 1
  %1165 = vperm.xlu0 %1164, %v843
  %v1166 = vpop.permute.xlu0 %1165
  %1169 = vset.pattern.permute.xlu0 1
  %1170 = vperm.xlu0 %1169, %v844
  %v1171 = vpop.permute.xlu0 %1170
  %1174 = vset.pattern.permute.xlu0 1
  %1175 = vperm.xlu0 %1174, %v845
  %v1176 = vpop.permute.xlu0 %1175
  %1179 = vset.pattern.permute.xlu0 1
  %1180 = vperm.xlu0 %1179, %v846
  %v1181 = vpop.permute.xlu0 %1180
  %1184 = vset.pattern.permute.xlu0 1
  %1185 = vperm.xlu0 %1184, %v847
  %v1186 = vpop.permute.xlu0 %1185
  %1189 = vset.pattern.permute.xlu0 1
  %1190 = vperm.xlu0 %1189, %v848
  %v1191 = vpop.permute.xlu0 %1190
  %1194 = vset.pattern.permute.xlu0 1
  %1195 = vperm.xlu0 %1194, %v849
  %v1196 = vpop.permute.xlu0 %1195
  %1199 = vset.pattern.permute.xlu0 1
  %1200 = vperm.xlu0 %1199, %v850
  %v1201 = vpop.permute.xlu0 %1200
  %1204 = vset.pattern.permute.xlu0 1
  %1205 = vperm.xlu0 %1204, %v851
  %v1206 = vpop.permute.xlu0 %1205
  %1209 = vset.pattern.permute.xlu0 1
  %1210 = vperm.xlu0 %1209, %v852
  %v1211 = vpop.permute.xlu0 %1210
  %1214 = vset.pattern.permute.xlu0 1
  %1215 = vperm.xlu0 %1214, %v853
  %v1216 = vpop.permute.xlu0 %1215
  %1219 = vset.pattern.permute.xlu0 1
  %1220 = vperm.xlu0 %1219, %v854
  %v1221 = vpop.permute.xlu0 %1220
  %1224 = vset.pattern.permute.xlu0 1
  %1225 = vperm.xlu0 %1224, %v855
  %v1226 = vpop.permute.xlu0 %1225
  %v1228 = vadd.f32 %v1011, %v1076
  %v1229 = vadd.f32 %v1012, %v1076
  %v1230 = vadd.f32 %v1013, %v1081
  %v1231 = vadd.f32 %v1014, %v1081
  %v1232 = vadd.f32 %v1015, %v1086
  %v1233 = vadd.f32 %v1016, %v1086
  %v1234 = vadd.f32 %v1017, %v1091
  %v1235 = vadd.f32 %v1018, %v1091
  %v1236 = vadd.f32 %v1019, %v1096
  %v1237 = vadd.f32 %v1020, %v1096
  %v1238 = vadd.f32 %v1021, %v1101
  %v1239 = vadd.f32 %v1022, %v1101
  %v1240 = vadd.f32 %v1023, %v1106
  %v1241 = vadd.f32 %v1024, %v1106
  %v1242 = vadd.f32 %v1025, %v1111
  %v1243 = vadd.f32 %v1026, %v1111
  %v1244 = vadd.f32 %v1027, %v1116
  %v1245 = vadd.f32 %v1028, %v1116
  %v1246 = vadd.f32 %v1029, %v1121
  %v1247 = vadd.f32 %v1030, %v1121
  %v1248 = vadd.f32 %v1031, %v1126
  %v1249 = vadd.f32 %v1032, %v1126
  %v1250 = vadd.f32 %v1033, %v1131
  %v1251 = vadd.f32 %v1034, %v1131
  %v1252 = vadd.f32 %v1035, %v1136
  %v1253 = vadd.f32 %v1036, %v1136
  %v1254 = vadd.f32 %v1037, %v1141
  %v1255 = vadd.f32 %v1038, %v1141
  %v1256 = vadd.f32 %v1039, %v1146
  %v1257 = vadd.f32 %v1040, %v1146
  %v1258 = vadd.f32 %v1041, %v1151
  %v1259 = vadd.f32 %v1042, %v1151
  %v1260 = vadd.f32 %v1043, %v1156
  %v1261 = vadd.f32 %v1044, %v1156
  %v1262 = vadd.f32 %v1045, %v1161
  %v1263 = vadd.f32 %v1046, %v1161
  %v1264 = vadd.f32 %v1047, %v1166
  %v1265 = vadd.f32 %v1048, %v1166
  %v1266 = vadd.f32 %v1049, %v1171
  %v1267 = vadd.f32 %v1050, %v1171
  %v1268 = vadd.f32 %v1051, %v1176
  %v1269 = vadd.f32 %v1052, %v1176
  %v1270 = vadd.f32 %v1053, %v1181
  %v1271 = vadd.f32 %v1054, %v1181
  %v1272 = vadd.f32 %v1055, %v1186
  %v1273 = vadd.f32 %v1056, %v1186
  %v1274 = vadd.f32 %v1057, %v1191
  %v1275 = vadd.f32 %v1058, %v1191
  %v1276 = vadd.f32 %v1059, %v1196
  %v1277 = vadd.f32 %v1060, %v1196
  %v1278 = vadd.f32 %v1061, %v1201
  %v1279 = vadd.f32 %v1062, %v1201
  %v1280 = vadd.f32 %v1063, %v1206
  %v1281 = vadd.f32 %v1064, %v1206
  %v1282 = vadd.f32 %v1065, %v1211
  %v1283 = vadd.f32 %v1066, %v1211
  %v1284 = vadd.f32 %v1067, %v1216
  %v1285 = vadd.f32 %v1068, %v1216
  %v1286 = vadd.f32 %v1069, %v1221
  %v1287 = vadd.f32 %v1070, %v1221
  %v1288 = vadd.f32 %v1071, %v1226
  %v1289 = vadd.f32 %v1072, %v1226
  %v1290 = vld [vmem:[%s1] sm:$0xff]
  %v1291 = vld [vmem:[%s1 + $0x8] sm:$0xff]
  %v1292 = vld [vmem:[%s1 + $0x10] sm:$0xff]
  %v1293 = vld [vmem:[%s1 + $0x18] sm:$0xff]
  %v1294 = vld [vmem:[%s1 + $0x20] sm:$0xff]
  %v1295 = vld [vmem:[%s1 + $0x28] sm:$0xff]
  %v1296 = vld [vmem:[%s1 + $0x30] sm:$0xff]
  %v1297 = vld [vmem:[%s1 + $0x38] sm:$0xff]
  %v1298 = vld [vmem:[%s1 + $0x40] sm:$0xff]
  %v1299 = vld [vmem:[%s1 + $0x48] sm:$0xff]
  %v1300 = vld [vmem:[%s1 + $0x50] sm:$0xff]
  %v1301 = vld [vmem:[%s1 + $0x58] sm:$0xff]
  %v1302 = vld [vmem:[%s1 + $0x60] sm:$0xff]
  %v1303 = vld [vmem:[%s1 + $0x68] sm:$0xff]
  %v1304 = vld [vmem:[%s1 + $0x70] sm:$0xff]
  %v1305 = vld [vmem:[%s1 + $0x78] sm:$0xff]
  %v1306 = vld [vmem:[%s1 + $0x80] sm:$0xff]
  %v1307 = vld [vmem:[%s1 + $0x88] sm:$0xff]
  %v1308 = vld [vmem:[%s1 + $0x90] sm:$0xff]
  %v1309 = vld [vmem:[%s1 + $0x98] sm:$0xff]
  %v1310 = vld [vmem:[%s1 + $0xa0] sm:$0xff]
  %v1311 = vld [vmem:[%s1 + $0xa8] sm:$0xff]
  %v1312 = vld [vmem:[%s1 + $0xb0] sm:$0xff]
  %v1313 = vld [vmem:[%s1 + $0xb8] sm:$0xff]
  %v1314 = vld [vmem:[%s1 + $0xc0] sm:$0xff]
  %v1315 = vld [vmem:[%s1 + $0xc8] sm:$0xff]
  %v1316 = vld [vmem:[%s1 + $0xd0] sm:$0xff]
  %v1317 = vld [vmem:[%s1 + $0xd8] sm:$0xff]
  %v1318 = vld [vmem:[%s1 + $0xe0] sm:$0xff]
  %v1319 = vld [vmem:[%s1 + $0xe8] sm:$0xff]
  %v1320 = vld [vmem:[%s1 + $0xf0] sm:$0x33]
  %v1321 = vpack.c.bf16 %v1230, %v1228
  %v1322 = vpack.c.bf16 %v1231, %v1229
  %v1323 = vpack.c.bf16 %v1234, %v1232
  %v1324 = vpack.c.bf16 %v1235, %v1233
  %v1325 = vpack.c.bf16 %v1238, %v1236
  %v1326 = vpack.c.bf16 %v1239, %v1237
  %v1327 = vpack.c.bf16 %v1242, %v1240
  %v1328 = vpack.c.bf16 %v1243, %v1241
  %v1329 = vpack.c.bf16 %v1246, %v1244
  %v1330 = vpack.c.bf16 %v1247, %v1245
  %v1331 = vpack.c.bf16 %v1250, %v1248
  %v1332 = vpack.c.bf16 %v1251, %v1249
  %v1333 = vpack.c.bf16 %v1254, %v1252
  %v1334 = vpack.c.bf16 %v1255, %v1253
  %v1335 = vpack.c.bf16 %v1258, %v1256
  %v1336 = vpack.c.bf16 %v1259, %v1257
  %v1337 = vpack.c.bf16 %v1262, %v1260
  %v1338 = vpack.c.bf16 %v1263, %v1261
  %v1339 = vpack.c.bf16 %v1266, %v1264
  %v1340 = vpack.c.bf16 %v1267, %v1265
  %v1341 = vpack.c.bf16 %v1270, %v1268
  %v1342 = vpack.c.bf16 %v1271, %v1269
  %v1343 = vpack.c.bf16 %v1274, %v1272
  %v1344 = vpack.c.bf16 %v1275, %v1273
  %v1345 = vpack.c.bf16 %v1278, %v1276
  %v1346 = vpack.c.bf16 %v1279, %v1277
  %v1347 = vpack.c.bf16 %v1282, %v1280
  %v1348 = vpack.c.bf16 %v1283, %v1281
  %v1349 = vpack.c.bf16 %v1286, %v1284
  %v1350 = vpack.c.bf16 %v1287, %v1285
  %v1351 = vpack.c.bf16 %v1288, %v1288
  %v1352 = vpack.c.bf16 %v1289, %v1289
  %v1384 = vunpack.c.l.b16 %v1290
  %v1385 = vunpack.c.h.b16 %v1290
  %v1386 = vunpack.c.l.b16 %v1291
  %v1387 = vunpack.c.h.b16 %v1291
  %v1388 = vunpack.c.l.b16 %v1292
  %v1389 = vunpack.c.h.b16 %v1292
  %v1390 = vunpack.c.l.b16 %v1293
  %v1391 = vunpack.c.h.b16 %v1293
  %v1392 = vunpack.c.l.b16 %v1294
  %v1393 = vunpack.c.h.b16 %v1294
  %v1394 = vunpack.c.l.b16 %v1295
  %v1395 = vunpack.c.h.b16 %v1295
  %v1396 = vunpack.c.l.b16 %v1296
  %v1397 = vunpack.c.h.b16 %v1296
  %v1398 = vunpack.c.l.b16 %v1297
  %v1399 = vunpack.c.h.b16 %v1297
  %v1400 = vunpack.c.l.b16 %v1298
  %v1401 = vunpack.c.h.b16 %v1298
  %v1402 = vunpack.c.l.b16 %v1299
  %v1403 = vunpack.c.h.b16 %v1299
  %v1404 = vunpack.c.l.b16 %v1300
  %v1405 = vunpack.c.h.b16 %v1300
  %v1406 = vunpack.c.l.b16 %v1301
  %v1407 = vunpack.c.h.b16 %v1301
  %v1408 = vunpack.c.l.b16 %v1302
  %v1409 = vunpack.c.h.b16 %v1302
  %v1410 = vunpack.c.l.b16 %v1303
  %v1411 = vunpack.c.h.b16 %v1303
  %v1412 = vunpack.c.l.b16 %v1304
  %v1413 = vunpack.c.h.b16 %v1304
  %v1414 = vunpack.c.l.b16 %v1305
  %v1415 = vunpack.c.h.b16 %v1305
  %v1416 = vunpack.c.l.b16 %v1306
  %v1417 = vunpack.c.h.b16 %v1306
  %v1418 = vunpack.c.l.b16 %v1307
  %v1419 = vunpack.c.h.b16 %v1307
  %v1420 = vunpack.c.l.b16 %v1308
  %v1421 = vunpack.c.h.b16 %v1308
  %v1422 = vunpack.c.l.b16 %v1309
  %v1423 = vunpack.c.h.b16 %v1309
  %v1424 = vunpack.c.l.b16 %v1310
  %v1425 = vunpack.c.h.b16 %v1310
  %v1426 = vunpack.c.l.b16 %v1311
  %v1427 = vunpack.c.h.b16 %v1311
  %v1428 = vunpack.c.l.b16 %v1312
  %v1429 = vunpack.c.h.b16 %v1312
  %v1430 = vunpack.c.l.b16 %v1313
  %v1431 = vunpack.c.h.b16 %v1313
  %v1432 = vunpack.c.l.b16 %v1314
  %v1433 = vunpack.c.h.b16 %v1314
  %v1434 = vunpack.c.l.b16 %v1315
  %v1435 = vunpack.c.h.b16 %v1315
  %v1436 = vunpack.c.l.b16 %v1316
  %v1437 = vunpack.c.h.b16 %v1316
  %v1438 = vunpack.c.l.b16 %v1317
  %v1439 = vunpack.c.h.b16 %v1317
  %v1440 = vunpack.c.l.b16 %v1318
  %v1441 = vunpack.c.h.b16 %v1318
  %v1442 = vunpack.c.l.b16 %v1319
  %v1443 = vunpack.c.h.b16 %v1319
  %v1444 = vunpack.c.l.b16 %v1320
  %v1445 = vunpack.c.h.b16 %v1320
  %v1446 = vpack.c.b16 %v1386, %v1384
  %v1447 = vpack.c.b16 %v1387, %v1385
  %v1448 = vpack.c.b16 %v1390, %v1388
  %v1449 = vpack.c.b16 %v1391, %v1389
  %v1450 = vpack.c.b16 %v1394, %v1392
  %v1451 = vpack.c.b16 %v1395, %v1393
  %v1452 = vpack.c.b16 %v1398, %v1396
  %v1453 = vpack.c.b16 %v1399, %v1397
  %v1454 = vpack.c.b16 %v1402, %v1400
  %v1455 = vpack.c.b16 %v1403, %v1401
  %v1456 = vpack.c.b16 %v1406, %v1404
  %v1457 = vpack.c.b16 %v1407, %v1405
  %v1458 = vpack.c.b16 %v1410, %v1408
  %v1459 = vpack.c.b16 %v1411, %v1409
  %v1460 = vpack.c.b16 %v1414, %v1412
  %v1461 = vpack.c.b16 %v1415, %v1413
  %v1462 = vpack.c.b16 %v1418, %v1416
  %v1463 = vpack.c.b16 %v1419, %v1417
  %v1464 = vpack.c.b16 %v1422, %v1420
  %v1465 = vpack.c.b16 %v1423, %v1421
  %v1466 = vpack.c.b16 %v1426, %v1424
  %v1467 = vpack.c.b16 %v1427, %v1425
  %v1468 = vpack.c.b16 %v1430, %v1428
  %v1469 = vpack.c.b16 %v1431, %v1429
  %v1470 = vpack.c.b16 %v1434, %v1432
  %v1471 = vpack.c.b16 %v1435, %v1433
  %v1472 = vpack.c.b16 %v1438, %v1436
  %v1473 = vpack.c.b16 %v1439, %v1437
  %v1474 = vpack.c.b16 %v1442, %v1440
  %v1475 = vpack.c.b16 %v1443, %v1441
  %v1476 = vpack.c.b16 %v1444, %v1444
  %v1477 = vpack.c.b16 %v1445, %v1445
  %vm1494 = vcmask 949248
  %v1496 = vsel %vm1494, %v1447, 0
  %v1499 = vsel %vm1494, %v1449, 0
  %v1502 = vsel %vm1494, %v1451, 0
  %v1505 = vsel %vm1494, %v1453, 0
  %v1508 = vsel %vm1494, %v1455, 0
  %v1511 = vsel %vm1494, %v1457, 0
  %v1514 = vsel %vm1494, %v1459, 0
  %v1517 = vsel %vm1494, %v1461, 0
  %v1520 = vsel %vm1494, %v1463, 0
  %v1523 = vsel %vm1494, %v1465, 0
  %v1526 = vsel %vm1494, %v1467, 0
  %v1529 = vsel %vm1494, %v1469, 0
  %v1532 = vsel %vm1494, %v1471, 0
  %v1535 = vsel %vm1494, %v1473, 0
  %v1538 = vsel %vm1494, %v1475, 0
  %v1541 = vsel %vm1494, %v1477, 0
  %vm1543 = vcmask 1041408
  %v1545 = vsel %vm1543, %v1351, 0
  %v1548 = vsel %vm1543, %v1352, 0
  %1550 = vmatprep.subr.bf16.mxu0 %v1322
  %1551 = vmatpush1.bf16.msra.mxu0 %v1321
  %1552 = vmatprep.subr.bf16.mxu0 %v1324
  %1553 = vmatpush1.bf16.msra.mxu0 %v1323
  %1554 = vmatprep.subr.bf16.mxu0 %v1326
  %1555 = vmatpush1.bf16.msra.mxu0 %v1325
  %1556 = vmatprep.subr.bf16.mxu0 %v1328
  %1557 = vmatpush1.bf16.msra.mxu0 %v1327
  %1558 = vmatprep.subr.bf16.mxu0 %v1330
  %1559 = vmatpush1.bf16.msra.mxu0 %v1329
  %1560 = vmatprep.subr.bf16.mxu0 %v1332
  %1561 = vmatpush1.bf16.msra.mxu0 %v1331
  %1562 = vmatprep.subr.bf16.mxu0 %v1334
  %1563 = vmatpush1.bf16.msra.mxu0 %v1333
  %1564 = vmatprep.subr.bf16.mxu0 %v1336
  %1565 = vmatpush1.bf16.msra.mxu0 %v1335
  %1566 = vmatprep.subr.bf16.mxu0 %v1338
  %1567 = vmatpush1.bf16.msra.mxu0 %v1337
  %1568 = vmatprep.subr.bf16.mxu0 %v1340
  %1569 = vmatpush1.bf16.msra.mxu0 %v1339
  %1570 = vmatprep.subr.bf16.mxu0 %v1342
  %1571 = vmatpush1.bf16.msra.mxu0 %v1341
  %1572 = vmatprep.subr.bf16.mxu0 %v1344
  %1573 = vmatpush1.bf16.msra.mxu0 %v1343
  %1574 = vmatprep.subr.bf16.mxu0 %v1346
  %1575 = vmatpush1.bf16.msra.mxu0 %v1345
  %1576 = vmatprep.subr.bf16.mxu0 %v1348
  %1577 = vmatpush1.bf16.msra.mxu0 %v1347
  %1578 = vmatprep.subr.bf16.mxu0 %v1350
  %1579 = vmatpush1.bf16.msra.mxu0 %v1349
  %1580 = vmatprep.subr.bf16.mxu0 %v1548
  %1581 = vmatpush1.bf16.msra.mxu0 %v1545
  %1582 = vmatprep.mubr.bf16.mxu0 %v1496
  %1583 = vmatmul.mubr.bf16.gmra.mrb[0].mxu0 %v1446
  %v1584 = vpop.f32.mrb[0].mxu0
  %v1585 = vadd.f32 0.0, %v1584
  %v1586 = vpop.f32.mrb[0].mxu0
  %v1587 = vadd.f32 0.0, %v1586
  %v1588 = vpop.f32.mrb[0].mxu0
  %v1589 = vadd.f32 0.0, %v1588
  %v1590 = vpop.f32.mrb[0].mxu0
  %v1591 = vadd.f32 0.0, %v1590
  %1592 = vmatprep.mubr.bf16.mxu0 %v1499
  %1593 = vmatmul.mubr.bf16.gmra.mrb[0].mxu0 %v1448
  %v1594 = vpop.f32.mrb[0].mxu0
  %v1595 = vadd.f32 0.0, %v1594
  %v1596 = vpop.f32.mrb[0].mxu0
  %v1597 = vadd.f32 0.0, %v1596
  %v1598 = vpop.f32.mrb[0].mxu0
  %v1599 = vadd.f32 0.0, %v1598
  %v1600 = vpop.f32.mrb[0].mxu0
  %v1601 = vadd.f32 0.0, %v1600
  %1602 = vmatprep.mubr.bf16.mxu0 %v1502
  %1603 = vmatmul.mubr.bf16.gmra.mrb[0].mxu0 %v1450
  %v1604 = vpop.f32.mrb[0].mxu0
  %v1605 = vadd.f32 0.0, %v1604
  %v1606 = vpop.f32.mrb[0].mxu0
  %v1607 = vadd.f32 0.0, %v1606
  %v1608 = vpop.f32.mrb[0].mxu0
  %v1609 = vadd.f32 0.0, %v1608
  %v1610 = vpop.f32.mrb[0].mxu0
  %v1611 = vadd.f32 0.0, %v1610
  %1612 = vmatprep.mubr.bf16.mxu0 %v1505
  %1613 = vmatmul.mubr.bf16.gmra.mrb[0].mxu0 %v1452
  %v1614 = vpop.f32.mrb[0].mxu0
  %v1615 = vadd.f32 0.0, %v1614
  %v1616 = vpop.f32.mrb[0].mxu0
  %v1617 = vadd.f32 0.0, %v1616
  %v1618 = vpop.f32.mrb[0].mxu0
  %v1619 = vadd.f32 0.0, %v1618
  %v1620 = vpop.f32.mrb[0].mxu0
  %v1621 = vadd.f32 0.0, %v1620
  %1622 = vmatprep.mubr.bf16.mxu0 %v1508
  %1623 = vmatmul.mubr.bf16.gmra.mrb[0].mxu0 %v1454
  %v1624 = vpop.f32.mrb[0].mxu0
  %v1625 = vadd.f32 0.0, %v1624
  %v1626 = vpop.f32.mrb[0].mxu0
  %v1627 = vadd.f32 0.0, %v1626
  %v1628 = vpop.f32.mrb[0].mxu0
  %v1629 = vadd.f32 0.0, %v1628
  %v1630 = vpop.f32.mrb[0].mxu0
  %v1631 = vadd.f32 0.0, %v1630
  %1632 = vmatprep.mubr.bf16.mxu0 %v1511
  %1633 = vmatmul.mubr.bf16.gmra.mrb[0].mxu0 %v1456
  %v1634 = vpop.f32.mrb[0].mxu0
  %v1635 = vadd.f32 0.0, %v1634
  %v1636 = vpop.f32.mrb[0].mxu0
  %v1637 = vadd.f32 0.0, %v1636
  %v1638 = vpop.f32.mrb[0].mxu0
  %v1639 = vadd.f32 0.0, %v1638
  %v1640 = vpop.f32.mrb[0].mxu0
  %v1641 = vadd.f32 0.0, %v1640
  %1642 = vmatprep.mubr.bf16.mxu0 %v1514
  %1643 = vmatmul.mubr.bf16.gmra.mrb[0].mxu0 %v1458
  %v1644 = vpop.f32.mrb[0].mxu0
  %v1645 = vadd.f32 0.0, %v1644
  %v1646 = vpop.f32.mrb[0].mxu0
  %v1647 = vadd.f32 0.0, %v1646
  %v1648 = vpop.f32.mrb[0].mxu0
  %v1649 = vadd.f32 0.0, %v1648
  %v1650 = vpop.f32.mrb[0].mxu0
  %v1651 = vadd.f32 0.0, %v1650
  %1652 = vmatprep.mubr.bf16.mxu0 %v1517
  %1653 = vmatmul.mubr.bf16.gmra.mrb[0].mxu0 %v1460
  %v1654 = vpop.f32.mrb[0].mxu0
  %v1655 = vadd.f32 0.0, %v1654
  %v1656 = vpop.f32.mrb[0].mxu0
  %v1657 = vadd.f32 0.0, %v1656
  %v1658 = vpop.f32.mrb[0].mxu0
  %v1659 = vadd.f32 0.0, %v1658
  %v1660 = vpop.f32.mrb[0].mxu0
  %v1661 = vadd.f32 0.0, %v1660
  %1662 = vmatprep.mubr.bf16.mxu0 %v1520
  %1663 = vmatmul.mubr.bf16.gmra.mrb[0].mxu0 %v1462
  %v1664 = vpop.f32.mrb[0].mxu0
  %v1665 = vadd.f32 0.0, %v1664
  %v1666 = vpop.f32.mrb[0].mxu0
  %v1667 = vadd.f32 0.0, %v1666
  %v1668 = vpop.f32.mrb[0].mxu0
  %v1669 = vadd.f32 0.0, %v1668
  %v1670 = vpop.f32.mrb[0].mxu0
  %v1671 = vadd.f32 0.0, %v1670
  %1672 = vmatprep.mubr.bf16.mxu0 %v1523
  %1673 = vmatmul.mubr.bf16.gmra.mrb[0].mxu0 %v1464
  %v1674 = vpop.f32.mrb[0].mxu0
  %v1675 = vadd.f32 0.0, %v1674
  %v1676 = vpop.f32.mrb[0].mxu0
  %v1677 = vadd.f32 0.0, %v1676
  %v1678 = vpop.f32.mrb[0].mxu0
  %v1679 = vadd.f32 0.0, %v1678
  %v1680 = vpop.f32.mrb[0].mxu0
  %v1681 = vadd.f32 0.0, %v1680
  %1682 = vmatprep.mubr.bf16.mxu0 %v1526
  %1683 = vmatmul.mubr.bf16.gmra.mrb[0].mxu0 %v1466
  %v1684 = vpop.f32.mrb[0].mxu0
  %v1685 = vadd.f32 0.0, %v1684
  %v1686 = vpop.f32.mrb[0].mxu0
  %v1687 = vadd.f32 0.0, %v1686
  %v1688 = vpop.f32.mrb[0].mxu0
  %v1689 = vadd.f32 0.0, %v1688
  %v1690 = vpop.f32.mrb[0].mxu0
  %v1691 = vadd.f32 0.0, %v1690
  %1692 = vmatprep.mubr.bf16.mxu0 %v1529
  %1693 = vmatmul.mubr.bf16.gmra.mrb[0].mxu0 %v1468
  %v1694 = vpop.f32.mrb[0].mxu0
  %v1695 = vadd.f32 0.0, %v1694
  %v1696 = vpop.f32.mrb[0].mxu0
  %v1697 = vadd.f32 0.0, %v1696
  %v1698 = vpop.f32.mrb[0].mxu0
  %v1699 = vadd.f32 0.0, %v1698
  %v1700 = vpop.f32.mrb[0].mxu0
  %v1701 = vadd.f32 0.0, %v1700
  %1702 = vmatprep.mubr.bf16.mxu0 %v1532
  %1703 = vmatmul.mubr.bf16.gmra.mrb[0].mxu0 %v1470
  %v1704 = vpop.f32.mrb[0].mxu0
  %v1705 = vadd.f32 0.0, %v1704
  %v1706 = vpop.f32.mrb[0].mxu0
  %v1707 = vadd.f32 0.0, %v1706
  %v1708 = vpop.f32.mrb[0].mxu0
  %v1709 = vadd.f32 0.0, %v1708
  %v1710 = vpop.f32.mrb[0].mxu0
  %v1711 = vadd.f32 0.0, %v1710
  %1712 = vmatprep.mubr.bf16.mxu0 %v1535
  %1713 = vmatmul.mubr.bf16.gmra.mrb[0].mxu0 %v1472
  %v1714 = vpop.f32.mrb[0].mxu0
  %v1715 = vadd.f32 0.0, %v1714
  %v1716 = vpop.f32.mrb[0].mxu0
  %v1717 = vadd.f32 0.0, %v1716
  %v1718 = vpop.f32.mrb[0].mxu0
  %v1719 = vadd.f32 0.0, %v1718
  %v1720 = vpop.f32.mrb[0].mxu0
  %v1721 = vadd.f32 0.0, %v1720
  %1722 = vmatprep.mubr.bf16.mxu0 %v1538
  %1723 = vmatmul.mubr.bf16.gmra.mrb[0].mxu0 %v1474
  %v1724 = vpop.f32.mrb[0].mxu0
  %v1725 = vadd.f32 0.0, %v1724
  %v1726 = vpop.f32.mrb[0].mxu0
  %v1727 = vadd.f32 0.0, %v1726
  %v1728 = vpop.f32.mrb[0].mxu0
  %v1729 = vadd.f32 0.0, %v1728
  %v1730 = vpop.f32.mrb[0].mxu0
  %v1731 = vadd.f32 0.0, %v1730
  %1732 = vmatprep.mubr.bf16.mxu0 %v1541
  %1733 = vmatmul.mubr.bf16.gmra.mrb[0].mxu0 %v1476
  %v1734 = vpop.f32.mrb[0].mxu0
  %v1735 = vadd.f32 0.0, %v1734
  %v1736 = vpop.f32.mrb[0].mxu0
  %v1737 = vadd.f32 0.0, %v1736
  %v1738 = vpop.f32.mrb[0].mxu0
  %v1739 = vpop.f32.mrb[0].mxu0
  %1740 = vdwg.mxu0
  %v1741 = vsel %vm107, %v1587, 0.0
  %v1742 = vadd.f32 %v1585, %v1741
  %1743 = vadd.xlane.f32.xlu0 %v1742
  %v1744 = vpop.xlane.xlu0 %1743
  %v1745 = vsel %vm107, %v1591, 0.0
  %v1746 = vadd.f32 %v1589, %v1745
  %1747 = vadd.xlane.f32.xlu0 %v1746
  %v1748 = vpop.xlane.xlu0 %1747
  %v1749 = vsel %vm107, %v1597, 0.0
  %v1750 = vadd.f32 %v1595, %v1749
  %1751 = vadd.xlane.f32.xlu0 %v1750
  %v1752 = vpop.xlane.xlu0 %1751
  %v1753 = vsel %vm107, %v1601, 0.0
  %v1754 = vadd.f32 %v1599, %v1753
  %1755 = vadd.xlane.f32.xlu0 %v1754
  %v1756 = vpop.xlane.xlu0 %1755
  %v1757 = vsel %vm107, %v1607, 0.0
  %v1758 = vadd.f32 %v1605, %v1757
  %1759 = vadd.xlane.f32.xlu0 %v1758
  %v1760 = vpop.xlane.xlu0 %1759
  %v1761 = vsel %vm107, %v1611, 0.0
  %v1762 = vadd.f32 %v1609, %v1761
  %1763 = vadd.xlane.f32.xlu0 %v1762
  %v1764 = vpop.xlane.xlu0 %1763
  %v1765 = vsel %vm107, %v1617, 0.0
  %v1766 = vadd.f32 %v1615, %v1765
  %1767 = vadd.xlane.f32.xlu0 %v1766
  %v1768 = vpop.xlane.xlu0 %1767
  %v1769 = vsel %vm107, %v1621, 0.0
  %v1770 = vadd.f32 %v1619, %v1769
  %1771 = vadd.xlane.f32.xlu0 %v1770
  %v1772 = vpop.xlane.xlu0 %1771
  %v1773 = vsel %vm107, %v1627, 0.0
  %v1774 = vadd.f32 %v1625, %v1773
  %1775 = vadd.xlane.f32.xlu0 %v1774
  %v1776 = vpop.xlane.xlu0 %1775
  %v1777 = vsel %vm107, %v1631, 0.0
  %v1778 = vadd.f32 %v1629, %v1777
  %1779 = vadd.xlane.f32.xlu0 %v1778
  %v1780 = vpop.xlane.xlu0 %1779
  %v1781 = vsel %vm107, %v1637, 0.0
  %v1782 = vadd.f32 %v1635, %v1781
  %1783 = vadd.xlane.f32.xlu0 %v1782
  %v1784 = vpop.xlane.xlu0 %1783
  %v1785 = vsel %vm107, %v1641, 0.0
  %v1786 = vadd.f32 %v1639, %v1785
  %1787 = vadd.xlane.f32.xlu0 %v1786
  %v1788 = vpop.xlane.xlu0 %1787
  %v1789 = vsel %vm107, %v1647, 0.0
  %v1790 = vadd.f32 %v1645, %v1789
  %1791 = vadd.xlane.f32.xlu0 %v1790
  %v1792 = vpop.xlane.xlu0 %1791
  %v1793 = vsel %vm107, %v1651, 0.0
  %v1794 = vadd.f32 %v1649, %v1793
  %1795 = vadd.xlane.f32.xlu0 %v1794
  %v1796 = vpop.xlane.xlu0 %1795
  %v1797 = vsel %vm107, %v1657, 0.0
  %v1798 = vadd.f32 %v1655, %v1797
  %1799 = vadd.xlane.f32.xlu0 %v1798
  %v1800 = vpop.xlane.xlu0 %1799
  %v1801 = vsel %vm107, %v1661, 0.0
  %v1802 = vadd.f32 %v1659, %v1801
  %1803 = vadd.xlane.f32.xlu0 %v1802
  %v1804 = vpop.xlane.xlu0 %1803
  %v1805 = vsel %vm107, %v1667, 0.0
  %v1806 = vadd.f32 %v1665, %v1805
  %1807 = vadd.xlane.f32.xlu0 %v1806
  %v1808 = vpop.xlane.xlu0 %1807
  %v1809 = vsel %vm107, %v1671, 0.0
  %v1810 = vadd.f32 %v1669, %v1809
  %1811 = vadd.xlane.f32.xlu0 %v1810
  %v1812 = vpop.xlane.xlu0 %1811
  %v1813 = vsel %vm107, %v1677, 0.0
  %v1814 = vadd.f32 %v1675, %v1813
  %1815 = vadd.xlane.f32.xlu0 %v1814
  %v1816 = vpop.xlane.xlu0 %1815
  %v1817 = vsel %vm107, %v1681, 0.0
  %v1818 = vadd.f32 %v1679, %v1817
  %1819 = vadd.xlane.f32.xlu0 %v1818
  %v1820 = vpop.xlane.xlu0 %1819
  %v1821 = vsel %vm107, %v1687, 0.0
  %v1822 = vadd.f32 %v1685, %v1821
  %1823 = vadd.xlane.f32.xlu0 %v1822
  %v1824 = vpop.xlane.xlu0 %1823
  %v1825 = vsel %vm107, %v1691, 0.0
  %v1826 = vadd.f32 %v1689, %v1825
  %1827 = vadd.xlane.f32.xlu0 %v1826
  %v1828 = vpop.xlane.xlu0 %1827
  %v1829 = vsel %vm107, %v1697, 0.0
  %v1830 = vadd.f32 %v1695, %v1829
  %1831 = vadd.xlane.f32.xlu0 %v1830
  %v1832 = vpop.xlane.xlu0 %1831
  %v1833 = vsel %vm107, %v1701, 0.0
  %v1834 = vadd.f32 %v1699, %v1833
  %1835 = vadd.xlane.f32.xlu0 %v1834
  %v1836 = vpop.xlane.xlu0 %1835
  %v1837 = vsel %vm107, %v1707, 0.0
  %v1838 = vadd.f32 %v1705, %v1837
  %1839 = vadd.xlane.f32.xlu0 %v1838
  %v1840 = vpop.xlane.xlu0 %1839
  %v1841 = vsel %vm107, %v1711, 0.0
  %v1842 = vadd.f32 %v1709, %v1841
  %1843 = vadd.xlane.f32.xlu0 %v1842
  %v1844 = vpop.xlane.xlu0 %1843
  %v1845 = vsel %vm107, %v1717, 0.0
  %v1846 = vadd.f32 %v1715, %v1845
  %1847 = vadd.xlane.f32.xlu0 %v1846
  %v1848 = vpop.xlane.xlu0 %1847
  %v1849 = vsel %vm107, %v1721, 0.0
  %v1850 = vadd.f32 %v1719, %v1849
  %1851 = vadd.xlane.f32.xlu0 %v1850
  %v1852 = vpop.xlane.xlu0 %1851
  %v1853 = vsel %vm107, %v1727, 0.0
  %v1854 = vadd.f32 %v1725, %v1853
  %1855 = vadd.xlane.f32.xlu0 %v1854
  %v1856 = vpop.xlane.xlu0 %1855
  %v1857 = vsel %vm107, %v1731, 0.0
  %v1858 = vadd.f32 %v1729, %v1857
  %1859 = vadd.xlane.f32.xlu0 %v1858
  %v1860 = vpop.xlane.xlu0 %1859
  %v1861 = vsel %vm228, %v1735, 0.0
  %v1862 = vsel %vm230, %v1737, 0.0
  %v1863 = vadd.f32 %v1861, %v1862
  %1864 = vadd.xlane.f32.xlu0 %v1863
  %v1865 = vpop.xlane.xlu0 %1864
  %v1866 = vmul.f32 %v1744, 0.0051020407
  %v1867 = vmul.f32 %v1748, 0.0051020407
  %v1868 = vmul.f32 %v1752, 0.0051020407
  %v1869 = vmul.f32 %v1756, 0.0051020407
  %v1870 = vmul.f32 %v1760, 0.0051020407
  %v1871 = vmul.f32 %v1764, 0.0051020407
  %v1872 = vmul.f32 %v1768, 0.0051020407
  %v1873 = vmul.f32 %v1772, 0.0051020407
  %v1874 = vmul.f32 %v1776, 0.0051020407
  %v1875 = vmul.f32 %v1780, 0.0051020407
  %v1876 = vmul.f32 %v1784, 0.0051020407
  %v1877 = vmul.f32 %v1788, 0.0051020407
  %v1878 = vmul.f32 %v1792, 0.0051020407
  %v1879 = vmul.f32 %v1796, 0.0051020407
  %v1880 = vmul.f32 %v1800, 0.0051020407
  %v1881 = vmul.f32 %v1804, 0.0051020407
  %v1882 = vmul.f32 %v1808, 0.0051020407
  %v1883 = vmul.f32 %v1812, 0.0051020407
  %v1884 = vmul.f32 %v1816, 0.0051020407
  %v1885 = vmul.f32 %v1820, 0.0051020407
  %v1886 = vmul.f32 %v1824, 0.0051020407
  %v1887 = vmul.f32 %v1828, 0.0051020407
  %v1888 = vmul.f32 %v1832, 0.0051020407
  %v1889 = vmul.f32 %v1836, 0.0051020407
  %v1890 = vmul.f32 %v1840, 0.0051020407
  %v1891 = vmul.f32 %v1844, 0.0051020407
  %v1892 = vmul.f32 %v1848, 0.0051020407
  %v1893 = vmul.f32 %v1852, 0.0051020407
  %v1894 = vmul.f32 %v1856, 0.0051020407
  %v1895 = vmul.f32 %v1860, 0.0051020407
  %v1896 = vmul.f32 %v1865, 0.0051020407
  %v1897 = vmul.f32 %v1585, %v1585
  %v1898 = vmul.f32 %v1587, %v1587
  %v1899 = vmul.f32 %v1589, %v1589
  %v1900 = vmul.f32 %v1591, %v1591
  %v1901 = vmul.f32 %v1595, %v1595
  %v1902 = vmul.f32 %v1597, %v1597
  %v1903 = vmul.f32 %v1599, %v1599
  %v1904 = vmul.f32 %v1601, %v1601
  %v1905 = vmul.f32 %v1605, %v1605
  %v1906 = vmul.f32 %v1607, %v1607
  %v1907 = vmul.f32 %v1609, %v1609
  %v1908 = vmul.f32 %v1611, %v1611
  %v1909 = vmul.f32 %v1615, %v1615
  %v1910 = vmul.f32 %v1617, %v1617
  %v1911 = vmul.f32 %v1619, %v1619
  %v1912 = vmul.f32 %v1621, %v1621
  %v1913 = vmul.f32 %v1625, %v1625
  %v1914 = vmul.f32 %v1627, %v1627
  %v1915 = vmul.f32 %v1629, %v1629
  %v1916 = vmul.f32 %v1631, %v1631
  %v1917 = vmul.f32 %v1635, %v1635
  %v1918 = vmul.f32 %v1637, %v1637
  %v1919 = vmul.f32 %v1639, %v1639
  %v1920 = vmul.f32 %v1641, %v1641
  %v1921 = vmul.f32 %v1645, %v1645
  %v1922 = vmul.f32 %v1647, %v1647
  %v1923 = vmul.f32 %v1649, %v1649
  %v1924 = vmul.f32 %v1651, %v1651
  %v1925 = vmul.f32 %v1655, %v1655
  %v1926 = vmul.f32 %v1657, %v1657
  %v1927 = vmul.f32 %v1659, %v1659
  %v1928 = vmul.f32 %v1661, %v1661
  %v1929 = vmul.f32 %v1665, %v1665
  %v1930 = vmul.f32 %v1667, %v1667
  %v1931 = vmul.f32 %v1669, %v1669
  %v1932 = vmul.f32 %v1671, %v1671
  %v1933 = vmul.f32 %v1675, %v1675
  %v1934 = vmul.f32 %v1677, %v1677
  %v1935 = vmul.f32 %v1679, %v1679
  %v1936 = vmul.f32 %v1681, %v1681
  %v1937 = vmul.f32 %v1685, %v1685
  %v1938 = vmul.f32 %v1687, %v1687
  %v1939 = vmul.f32 %v1689, %v1689
  %v1940 = vmul.f32 %v1691, %v1691
  %v1941 = vmul.f32 %v1695, %v1695
  %v1942 = vmul.f32 %v1697, %v1697
  %v1943 = vmul.f32 %v1699, %v1699
  %v1944 = vmul.f32 %v1701, %v1701
  %v1945 = vmul.f32 %v1705, %v1705
  %v1946 = vmul.f32 %v1707, %v1707
  %v1947 = vmul.f32 %v1709, %v1709
  %v1948 = vmul.f32 %v1711, %v1711
  %v1949 = vmul.f32 %v1715, %v1715
  %v1950 = vmul.f32 %v1717, %v1717
  %v1951 = vmul.f32 %v1719, %v1719
  %v1952 = vmul.f32 %v1721, %v1721
  %v1953 = vmul.f32 %v1725, %v1725
  %v1954 = vmul.f32 %v1727, %v1727
  %v1955 = vmul.f32 %v1729, %v1729
  %v1956 = vmul.f32 %v1731, %v1731
  %v1957 = vmul.f32 %v1735, %v1735
  %v1958 = vmul.f32 %v1737, %v1737
  %v1959 = vsel %vm107, %v1898, 0.0
  %v1960 = vadd.f32 %v1897, %v1959
  %1961 = vadd.xlane.f32.xlu0 %v1960
  %v1962 = vpop.xlane.xlu0 %1961
  %v1963 = vsel %vm107, %v1900, 0.0
  %v1964 = vadd.f32 %v1899, %v1963
  %1965 = vadd.xlane.f32.xlu0 %v1964
  %v1966 = vpop.xlane.xlu0 %1965
  %v1967 = vsel %vm107, %v1902, 0.0
  %v1968 = vadd.f32 %v1901, %v1967
  %1969 = vadd.xlane.f32.xlu0 %v1968
  %v1970 = vpop.xlane.xlu0 %1969
  %v1971 = vsel %vm107, %v1904, 0.0
  %v1972 = vadd.f32 %v1903, %v1971
  %1973 = vadd.xlane.f32.xlu0 %v1972
  %v1974 = vpop.xlane.xlu0 %1973
  %v1975 = vsel %vm107, %v1906, 0.0
  %v1976 = vadd.f32 %v1905, %v1975
  %1977 = vadd.xlane.f32.xlu0 %v1976
  %v1978 = vpop.xlane.xlu0 %1977
  %v1979 = vsel %vm107, %v1908, 0.0
  %v1980 = vadd.f32 %v1907, %v1979
  %1981 = vadd.xlane.f32.xlu0 %v1980
  %v1982 = vpop.xlane.xlu0 %1981
  %v1983 = vsel %vm107, %v1910, 0.0
  %v1984 = vadd.f32 %v1909, %v1983
  %1985 = vadd.xlane.f32.xlu0 %v1984
  %v1986 = vpop.xlane.xlu0 %1985
  %v1987 = vsel %vm107, %v1912, 0.0
  %v1988 = vadd.f32 %v1911, %v1987
  %1989 = vadd.xlane.f32.xlu0 %v1988
  %v1990 = vpop.xlane.xlu0 %1989
  %v1991 = vsel %vm107, %v1914, 0.0
  %v1992 = vadd.f32 %v1913, %v1991
  %1993 = vadd.xlane.f32.xlu0 %v1992
  %v1994 = vpop.xlane.xlu0 %1993
  %v1995 = vsel %vm107, %v1916, 0.0
  %v1996 = vadd.f32 %v1915, %v1995
  %1997 = vadd.xlane.f32.xlu0 %v1996
  %v1998 = vpop.xlane.xlu0 %1997
  %v1999 = vsel %vm107, %v1918, 0.0
  %v2000 = vadd.f32 %v1917, %v1999
  %2001 = vadd.xlane.f32.xlu0 %v2000
  %v2002 = vpop.xlane.xlu0 %2001
  %v2003 = vsel %vm107, %v1920, 0.0
  %v2004 = vadd.f32 %v1919, %v2003
  %2005 = vadd.xlane.f32.xlu0 %v2004
  %v2006 = vpop.xlane.xlu0 %2005
  %v2007 = vsel %vm107, %v1922, 0.0
  %v2008 = vadd.f32 %v1921, %v2007
  %2009 = vadd.xlane.f32.xlu0 %v2008
  %v2010 = vpop.xlane.xlu0 %2009
  %v2011 = vsel %vm107, %v1924, 0.0
  %v2012 = vadd.f32 %v1923, %v2011
  %2013 = vadd.xlane.f32.xlu0 %v2012
  %v2014 = vpop.xlane.xlu0 %2013
  %v2015 = vsel %vm107, %v1926, 0.0
  %v2016 = vadd.f32 %v1925, %v2015
  %2017 = vadd.xlane.f32.xlu0 %v2016
  %v2018 = vpop.xlane.xlu0 %2017
  %v2019 = vsel %vm107, %v1928, 0.0
  %v2020 = vadd.f32 %v1927, %v2019
  %2021 = vadd.xlane.f32.xlu0 %v2020
  %v2022 = vpop.xlane.xlu0 %2021
  %v2023 = vsel %vm107, %v1930, 0.0
  %v2024 = vadd.f32 %v1929, %v2023
  %2025 = vadd.xlane.f32.xlu0 %v2024
  %v2026 = vpop.xlane.xlu0 %2025
  %v2027 = vsel %vm107, %v1932, 0.0
  %v2028 = vadd.f32 %v1931, %v2027
  %2029 = vadd.xlane.f32.xlu0 %v2028
  %v2030 = vpop.xlane.xlu0 %2029
  %v2031 = vsel %vm107, %v1934, 0.0
  %v2032 = vadd.f32 %v1933, %v2031
  %2033 = vadd.xlane.f32.xlu0 %v2032
  %v2034 = vpop.xlane.xlu0 %2033
  %v2035 = vsel %vm107, %v1936, 0.0
  %v2036 = vadd.f32 %v1935, %v2035
  %2037 = vadd.xlane.f32.xlu0 %v2036
  %v2038 = vpop.xlane.xlu0 %2037
  %v2039 = vsel %vm107, %v1938, 0.0
  %v2040 = vadd.f32 %v1937, %v2039
  %2041 = vadd.xlane.f32.xlu0 %v2040
  %v2042 = vpop.xlane.xlu0 %2041
  %v2043 = vsel %vm107, %v1940, 0.0
  %v2044 = vadd.f32 %v1939, %v2043
  %2045 = vadd.xlane.f32.xlu0 %v2044
  %v2046 = vpop.xlane.xlu0 %2045
  %v2047 = vsel %vm107, %v1942, 0.0
  %v2048 = vadd.f32 %v1941, %v2047
  %2049 = vadd.xlane.f32.xlu0 %v2048
  %v2050 = vpop.xlane.xlu0 %2049
  %v2051 = vsel %vm107, %v1944, 0.0
  %v2052 = vadd.f32 %v1943, %v2051
  %2053 = vadd.xlane.f32.xlu0 %v2052
  %v2054 = vpop.xlane.xlu0 %2053
  %v2055 = vsel %vm107, %v1946, 0.0
  %v2056 = vadd.f32 %v1945, %v2055
  %2057 = vadd.xlane.f32.xlu0 %v2056
  %v2058 = vpop.xlane.xlu0 %2057
  %v2059 = vsel %vm107, %v1948, 0.0
  %v2060 = vadd.f32 %v1947, %v2059
  %2061 = vadd.xlane.f32.xlu0 %v2060
  %v2062 = vpop.xlane.xlu0 %2061
  %v2063 = vsel %vm107, %v1950, 0.0
  %v2064 = vadd.f32 %v1949, %v2063
  %2065 = vadd.xlane.f32.xlu0 %v2064
  %v2066 = vpop.xlane.xlu0 %2065
  %v2067 = vsel %vm107, %v1952, 0.0
  %v2068 = vadd.f32 %v1951, %v2067
  %2069 = vadd.xlane.f32.xlu0 %v2068
  %v2070 = vpop.xlane.xlu0 %2069
  %v2071 = vsel %vm107, %v1954, 0.0
  %v2072 = vadd.f32 %v1953, %v2071
  %2073 = vadd.xlane.f32.xlu0 %v2072
  %v2074 = vpop.xlane.xlu0 %2073
  %v2075 = vsel %vm107, %v1956, 0.0
  %v2076 = vadd.f32 %v1955, %v2075
  %2077 = vadd.xlane.f32.xlu0 %v2076
  %v2078 = vpop.xlane.xlu0 %2077
  %v2079 = vsel %vm228, %v1957, 0.0
  %v2080 = vsel %vm230, %v1958, 0.0
  %v2081 = vadd.f32 %v2079, %v2080
  %2082 = vadd.xlane.f32.xlu0 %v2081
  %v2083 = vpop.xlane.xlu0 %2082
  %v2084 = vmul.f32 %v1962, 0.0051020407
  %v2085 = vmul.f32 %v1966, 0.0051020407
  %v2086 = vmul.f32 %v1970, 0.0051020407
  %v2087 = vmul.f32 %v1974, 0.0051020407
  %v2088 = vmul.f32 %v1978, 0.0051020407
  %v2089 = vmul.f32 %v1982, 0.0051020407
  %v2090 = vmul.f32 %v1986, 0.0051020407
  %v2091 = vmul.f32 %v1990, 0.0051020407
  %v2092 = vmul.f32 %v1994, 0.0051020407
  %v2093 = vmul.f32 %v1998, 0.0051020407
  %v2094 = vmul.f32 %v2002, 0.0051020407
  %v2095 = vmul.f32 %v2006, 0.0051020407
  %v2096 = vmul.f32 %v2010, 0.0051020407
  %v2097 = vmul.f32 %v2014, 0.0051020407
  %v2098 = vmul.f32 %v2018, 0.0051020407
  %v2099 = vmul.f32 %v2022, 0.0051020407
  %v2100 = vmul.f32 %v2026, 0.0051020407
  %v2101 = vmul.f32 %v2030, 0.0051020407
  %v2102 = vmul.f32 %v2034, 0.0051020407
  %v2103 = vmul.f32 %v2038, 0.0051020407
  %v2104 = vmul.f32 %v2042, 0.0051020407
  %v2105 = vmul.f32 %v2046, 0.0051020407
  %v2106 = vmul.f32 %v2050, 0.0051020407
  %v2107 = vmul.f32 %v2054, 0.0051020407
  %v2108 = vmul.f32 %v2058, 0.0051020407
  %v2109 = vmul.f32 %v2062, 0.0051020407
  %v2110 = vmul.f32 %v2066, 0.0051020407
  %v2111 = vmul.f32 %v2070, 0.0051020407
  %v2112 = vmul.f32 %v2074, 0.0051020407
  %v2113 = vmul.f32 %v2078, 0.0051020407
  %v2114 = vmul.f32 %v2083, 0.0051020407
  %v2115 = vmul.f32 %v1866, %v1866
  %v2116 = vmul.f32 %v1867, %v1867
  %v2117 = vmul.f32 %v1868, %v1868
  %v2118 = vmul.f32 %v1869, %v1869
  %v2119 = vmul.f32 %v1870, %v1870
  %v2120 = vmul.f32 %v1871, %v1871
  %v2121 = vmul.f32 %v1872, %v1872
  %v2122 = vmul.f32 %v1873, %v1873
  %v2123 = vmul.f32 %v1874, %v1874
  %v2124 = vmul.f32 %v1875, %v1875
  %v2125 = vmul.f32 %v1876, %v1876
  %v2126 = vmul.f32 %v1877, %v1877
  %v2127 = vmul.f32 %v1878, %v1878
  %v2128 = vmul.f32 %v1879, %v1879
  %v2129 = vmul.f32 %v1880, %v1880
  %v2130 = vmul.f32 %v1881, %v1881
  %v2131 = vmul.f32 %v1882, %v1882
  %v2132 = vmul.f32 %v1883, %v1883
  %v2133 = vmul.f32 %v1884, %v1884
  %v2134 = vmul.f32 %v1885, %v1885
  %v2135 = vmul.f32 %v1886, %v1886
  %v2136 = vmul.f32 %v1887, %v1887
  %v2137 = vmul.f32 %v1888, %v1888
  %v2138 = vmul.f32 %v1889, %v1889
  %v2139 = vmul.f32 %v1890, %v1890
  %v2140 = vmul.f32 %v1891, %v1891
  %v2141 = vmul.f32 %v1892, %v1892
  %v2142 = vmul.f32 %v1893, %v1893
  %v2143 = vmul.f32 %v1894, %v1894
  %v2144 = vmul.f32 %v1895, %v1895
  %v2145 = vmul.f32 %v1896, %v1896
  %v2146 = vsub.f32 %v2084, %v2115
  %v2147 = vsub.f32 %v2085, %v2116
  %v2148 = vsub.f32 %v2086, %v2117
  %v2149 = vsub.f32 %v2087, %v2118
  %v2150 = vsub.f32 %v2088, %v2119
  %v2151 = vsub.f32 %v2089, %v2120
  %v2152 = vsub.f32 %v2090, %v2121
  %v2153 = vsub.f32 %v2091, %v2122
  %v2154 = vsub.f32 %v2092, %v2123
  %v2155 = vsub.f32 %v2093, %v2124
  %v2156 = vsub.f32 %v2094, %v2125
  %v2157 = vsub.f32 %v2095, %v2126
  %v2158 = vsub.f32 %v2096, %v2127
  %v2159 = vsub.f32 %v2097, %v2128
  %v2160 = vsub.f32 %v2098, %v2129
  %v2161 = vsub.f32 %v2099, %v2130
  %v2162 = vsub.f32 %v2100, %v2131
  %v2163 = vsub.f32 %v2101, %v2132
  %v2164 = vsub.f32 %v2102, %v2133
  %v2165 = vsub.f32 %v2103, %v2134
  %v2166 = vsub.f32 %v2104, %v2135
  %v2167 = vsub.f32 %v2105, %v2136
  %v2168 = vsub.f32 %v2106, %v2137
  %v2169 = vsub.f32 %v2107, %v2138
  %v2170 = vsub.f32 %v2108, %v2139
  %v2171 = vsub.f32 %v2109, %v2140
  %v2172 = vsub.f32 %v2110, %v2141
  %v2173 = vsub.f32 %v2111, %v2142
  %v2174 = vsub.f32 %v2112, %v2143
  %v2175 = vsub.f32 %v2113, %v2144
  %v2176 = vsub.f32 %v2114, %v2145
  %v2177 = vmax.f32 %v2146, 0.0
  %v2178 = vmax.f32 %v2147, 0.0
  %v2179 = vmax.f32 %v2148, 0.0
  %v2180 = vmax.f32 %v2149, 0.0
  %v2181 = vmax.f32 %v2150, 0.0
  %v2182 = vmax.f32 %v2151, 0.0
  %v2183 = vmax.f32 %v2152, 0.0
  %v2184 = vmax.f32 %v2153, 0.0
  %v2185 = vmax.f32 %v2154, 0.0
  %v2186 = vmax.f32 %v2155, 0.0
  %v2187 = vmax.f32 %v2156, 0.0
  %v2188 = vmax.f32 %v2157, 0.0
  %v2189 = vmax.f32 %v2158, 0.0
  %v2190 = vmax.f32 %v2159, 0.0
  %v2191 = vmax.f32 %v2160, 0.0
  %v2192 = vmax.f32 %v2161, 0.0
  %v2193 = vmax.f32 %v2162, 0.0
  %v2194 = vmax.f32 %v2163, 0.0
  %v2195 = vmax.f32 %v2164, 0.0
  %v2196 = vmax.f32 %v2165, 0.0
  %v2197 = vmax.f32 %v2166, 0.0
  %v2198 = vmax.f32 %v2167, 0.0
  %v2199 = vmax.f32 %v2168, 0.0
  %v2200 = vmax.f32 %v2169, 0.0
  %v2201 = vmax.f32 %v2170, 0.0
  %v2202 = vmax.f32 %v2171, 0.0
  %v2203 = vmax.f32 %v2172, 0.0
  %v2204 = vmax.f32 %v2173, 0.0
  %v2205 = vmax.f32 %v2174, 0.0
  %v2206 = vmax.f32 %v2175, 0.0
  %v2207 = vmax.f32 %v2176, 0.0
  %v2208 = vadd.f32 %v2177, 1e-05
  %v2209 = vadd.f32 %v2178, 1e-05
  %v2210 = vadd.f32 %v2179, 1e-05
  %v2211 = vadd.f32 %v2180, 1e-05
  %v2212 = vadd.f32 %v2181, 1e-05
  %v2213 = vadd.f32 %v2182, 1e-05
  %v2214 = vadd.f32 %v2183, 1e-05
  %v2215 = vadd.f32 %v2184, 1e-05
  %v2216 = vadd.f32 %v2185, 1e-05
  %v2217 = vadd.f32 %v2186, 1e-05
  %v2218 = vadd.f32 %v2187, 1e-05
  %v2219 = vadd.f32 %v2188, 1e-05
  %v2220 = vadd.f32 %v2189, 1e-05
  %v2221 = vadd.f32 %v2190, 1e-05
  %v2222 = vadd.f32 %v2191, 1e-05
  %v2223 = vadd.f32 %v2192, 1e-05
  %v2224 = vadd.f32 %v2193, 1e-05
  %v2225 = vadd.f32 %v2194, 1e-05
  %v2226 = vadd.f32 %v2195, 1e-05
  %v2227 = vadd.f32 %v2196, 1e-05
  %v2228 = vadd.f32 %v2197, 1e-05
  %v2229 = vadd.f32 %v2198, 1e-05
  %v2230 = vadd.f32 %v2199, 1e-05
  %v2231 = vadd.f32 %v2200, 1e-05
  %v2232 = vadd.f32 %v2201, 1e-05
  %v2233 = vadd.f32 %v2202, 1e-05
  %v2234 = vadd.f32 %v2203, 1e-05
  %v2235 = vadd.f32 %v2204, 1e-05
  %v2236 = vadd.f32 %v2205, 1e-05
  %v2237 = vadd.f32 %v2206, 1e-05
  %v2238 = vadd.f32 %v2207, 1e-05
  %v2239 = vrsqrt.pop %v2208
  %v2240 = vrsqrt.pop %v2209
  %v2241 = vrsqrt.pop %v2210
  %v2242 = vrsqrt.pop %v2211
  %v2243 = vrsqrt.pop %v2212
  %v2244 = vrsqrt.pop %v2213
  %v2245 = vrsqrt.pop %v2214
  %v2246 = vrsqrt.pop %v2215
  %v2247 = vrsqrt.pop %v2216
  %v2248 = vrsqrt.pop %v2217
  %v2249 = vrsqrt.pop %v2218
  %v2250 = vrsqrt.pop %v2219
  %v2251 = vrsqrt.pop %v2220
  %v2252 = vrsqrt.pop %v2221
  %v2253 = vrsqrt.pop %v2222
  %v2254 = vrsqrt.pop %v2223
  %v2255 = vrsqrt.pop %v2224
  %v2256 = vrsqrt.pop %v2225
  %v2257 = vrsqrt.pop %v2226
  %v2258 = vrsqrt.pop %v2227
  %v2259 = vrsqrt.pop %v2228
  %v2260 = vrsqrt.pop %v2229
  %v2261 = vrsqrt.pop %v2230
  %v2262 = vrsqrt.pop %v2231
  %v2263 = vrsqrt.pop %v2232
  %v2264 = vrsqrt.pop %v2233
  %v2265 = vrsqrt.pop %v2234
  %v2266 = vrsqrt.pop %v2235
  %v2267 = vrsqrt.pop %v2236
  %v2268 = vrsqrt.pop %v2237
  %v2269 = vrsqrt.pop %v2238
  %v2270 = vmul.f32 %v76, %v2239
  %v2271 = vmul.f32 %v77, %v2240
  %v2272 = vmul.f32 %v78, %v2241
  %v2273 = vmul.f32 %v79, %v2242
  %v2274 = vmul.f32 %v80, %v2243
  %v2275 = vmul.f32 %v81, %v2244
  %v2276 = vmul.f32 %v82, %v2245
  %v2277 = vmul.f32 %v83, %v2246
  %v2278 = vmul.f32 %v84, %v2247
  %v2279 = vmul.f32 %v85, %v2248
  %v2280 = vmul.f32 %v86, %v2249
  %v2281 = vmul.f32 %v87, %v2250
  %v2282 = vmul.f32 %v88, %v2251
  %v2283 = vmul.f32 %v89, %v2252
  %v2284 = vmul.f32 %v90, %v2253
  %v2285 = vmul.f32 %v91, %v2254
  %v2286 = vmul.f32 %v92, %v2255
  %v2287 = vmul.f32 %v93, %v2256
  %v2288 = vmul.f32 %v94, %v2257
  %v2289 = vmul.f32 %v95, %v2258
  %v2290 = vmul.f32 %v96, %v2259
  %v2291 = vmul.f32 %v97, %v2260
  %v2292 = vmul.f32 %v98, %v2261
  %v2293 = vmul.f32 %v99, %v2262
  %v2294 = vmul.f32 %v100, %v2263
  %v2295 = vmul.f32 %v101, %v2264
  %v2296 = vmul.f32 %v102, %v2265
  %v2297 = vmul.f32 %v103, %v2266
  %v2298 = vmul.f32 %v104, %v2267
  %v2299 = vmul.f32 %v105, %v2268
  %v2300 = vmul.f32 %v106, %v2269
  %v2301 = vmul.f32 %v1866, %v2270
  %v2302 = vmul.f32 %v1867, %v2271
  %v2303 = vmul.f32 %v1868, %v2272
  %v2304 = vmul.f32 %v1869, %v2273
  %v2305 = vmul.f32 %v1870, %v2274
  %v2306 = vmul.f32 %v1871, %v2275
  %v2307 = vmul.f32 %v1872, %v2276
  %v2308 = vmul.f32 %v1873, %v2277
  %v2309 = vmul.f32 %v1874, %v2278
  %v2310 = vmul.f32 %v1875, %v2279
  %v2311 = vmul.f32 %v1876, %v2280
  %v2312 = vmul.f32 %v1877, %v2281
  %v2313 = vmul.f32 %v1878, %v2282
  %v2314 = vmul.f32 %v1879, %v2283
  %v2315 = vmul.f32 %v1880, %v2284
  %v2316 = vmul.f32 %v1881, %v2285
  %v2317 = vmul.f32 %v1882, %v2286
  %v2318 = vmul.f32 %v1883, %v2287
  %v2319 = vmul.f32 %v1884, %v2288
  %v2320 = vmul.f32 %v1885, %v2289
  %v2321 = vmul.f32 %v1886, %v2290
  %v2322 = vmul.f32 %v1887, %v2291
  %v2323 = vmul.f32 %v1888, %v2292
  %v2324 = vmul.f32 %v1889, %v2293
  %v2325 = vmul.f32 %v1890, %v2294
  %v2326 = vmul.f32 %v1891, %v2295
  %v2327 = vmul.f32 %v1892, %v2296
  %v2328 = vmul.f32 %v1893, %v2297
  %v2329 = vmul.f32 %v1894, %v2298
  %v2330 = vmul.f32 %v1895, %v2299
  %v2331 = vmul.f32 %v1896, %v2300
  %2363 = vrot.lane.b32.xlu0 %v2301, 1
  %v2364 = vpop.permute.xlu0 %2363
  %2365 = vrot.lane.b32.xlu0 %v2302, 1
  %v2366 = vpop.permute.xlu0 %2365
  %2367 = vrot.lane.b32.xlu0 %v2303, 1
  %v2368 = vpop.permute.xlu0 %2367
  %2369 = vrot.lane.b32.xlu0 %v2304, 1
  %v2370 = vpop.permute.xlu0 %2369
  %2371 = vrot.lane.b32.xlu0 %v2305, 1
  %v2372 = vpop.permute.xlu0 %2371
  %2373 = vrot.lane.b32.xlu0 %v2306, 1
  %v2374 = vpop.permute.xlu0 %2373
  %2375 = vrot.lane.b32.xlu0 %v2307, 1
  %v2376 = vpop.permute.xlu0 %2375
  %2377 = vrot.lane.b32.xlu0 %v2308, 1
  %v2378 = vpop.permute.xlu0 %2377
  %2379 = vrot.lane.b32.xlu0 %v2309, 1
  %v2380 = vpop.permute.xlu0 %2379
  %2381 = vrot.lane.b32.xlu0 %v2310, 1
  %v2382 = vpop.permute.xlu0 %2381
  %2383 = vrot.lane.b32.xlu0 %v2311, 1
  %v2384 = vpop.permute.xlu0 %2383
  %2385 = vrot.lane.b32.xlu0 %v2312, 1
  %v2386 = vpop.permute.xlu0 %2385
  %2387 = vrot.lane.b32.xlu0 %v2313, 1
  %v2388 = vpop.permute.xlu0 %2387
  %2389 = vrot.lane.b32.xlu0 %v2314, 1
  %v2390 = vpop.permute.xlu0 %2389
  %2391 = vrot.lane.b32.xlu0 %v2315, 1
  %v2392 = vpop.permute.xlu0 %2391
  %2393 = vrot.lane.b32.xlu0 %v2316, 1
  %v2394 = vpop.permute.xlu0 %2393
  %2395 = vrot.lane.b32.xlu0 %v2317, 1
  %v2396 = vpop.permute.xlu0 %2395
  %2397 = vrot.lane.b32.xlu0 %v2318, 1
  %v2398 = vpop.permute.xlu0 %2397
  %2399 = vrot.lane.b32.xlu0 %v2319, 1
  %v2400 = vpop.permute.xlu0 %2399
  %2401 = vrot.lane.b32.xlu0 %v2320, 1
  %v2402 = vpop.permute.xlu0 %2401
  %2403 = vrot.lane.b32.xlu0 %v2321, 1
  %v2404 = vpop.permute.xlu0 %2403
  %2405 = vrot.lane.b32.xlu0 %v2322, 1
  %v2406 = vpop.permute.xlu0 %2405
  %2407 = vrot.lane.b32.xlu0 %v2323, 1
  %v2408 = vpop.permute.xlu0 %2407
  %2409 = vrot.lane.b32.xlu0 %v2324, 1
  %v2410 = vpop.permute.xlu0 %2409
  %2411 = vrot.lane.b32.xlu0 %v2325, 1
  %v2412 = vpop.permute.xlu0 %2411
  %2413 = vrot.lane.b32.xlu0 %v2326, 1
  %v2414 = vpop.permute.xlu0 %2413
  %2415 = vrot.lane.b32.xlu0 %v2327, 1
  %v2416 = vpop.permute.xlu0 %2415
  %2417 = vrot.lane.b32.xlu0 %v2328, 1
  %v2418 = vpop.permute.xlu0 %2417
  %2419 = vrot.lane.b32.xlu0 %v2329, 1
  %v2420 = vpop.permute.xlu0 %2419
  %2421 = vrot.lane.b32.xlu0 %v2330, 1
  %v2422 = vpop.permute.xlu0 %2421
  %2423 = vrot.lane.b32.xlu0 %v2331, 1
  %v2424 = vpop.permute.xlu0 %2423
  %v2456 = vsub.f32 %v76, %v2364
  %v2457 = vsub.f32 %v77, %v2366
  %v2458 = vsub.f32 %v78, %v2368
  %v2459 = vsub.f32 %v79, %v2370
  %v2460 = vsub.f32 %v80, %v2372
  %v2461 = vsub.f32 %v81, %v2374
  %v2462 = vsub.f32 %v82, %v2376
  %v2463 = vsub.f32 %v83, %v2378
  %v2464 = vsub.f32 %v84, %v2380
  %v2465 = vsub.f32 %v85, %v2382
  %v2466 = vsub.f32 %v86, %v2384
  %v2467 = vsub.f32 %v87, %v2386
  %v2468 = vsub.f32 %v88, %v2388
  %v2469 = vsub.f32 %v89, %v2390
  %v2470 = vsub.f32 %v90, %v2392
  %v2471 = vsub.f32 %v91, %v2394
  %v2472 = vsub.f32 %v92, %v2396
  %v2473 = vsub.f32 %v93, %v2398
  %v2474 = vsub.f32 %v94, %v2400
  %v2475 = vsub.f32 %v95, %v2402
  %v2476 = vsub.f32 %v96, %v2404
  %v2477 = vsub.f32 %v97, %v2406
  %v2478 = vsub.f32 %v98, %v2408
  %v2479 = vsub.f32 %v99, %v2410
  %v2480 = vsub.f32 %v100, %v2412
  %v2481 = vsub.f32 %v101, %v2414
  %v2482 = vsub.f32 %v102, %v2416
  %v2483 = vsub.f32 %v103, %v2418
  %v2484 = vsub.f32 %v104, %v2420
  %v2485 = vsub.f32 %v105, %v2422
  %v2486 = vsub.f32 %v106, %v2424
  %2488 = vset.pattern.permute.xlu0 2
  %2489 = vperm.xlu0 %2488, %v2270
  %v2490 = vpop.permute.xlu0 %2489
  %2493 = vset.pattern.permute.xlu0 2
  %2494 = vperm.xlu0 %2493, %v2271
  %v2495 = vpop.permute.xlu0 %2494
  %2498 = vset.pattern.permute.xlu0 2
  %2499 = vperm.xlu0 %2498, %v2272
  %v2500 = vpop.permute.xlu0 %2499
  %2503 = vset.pattern.permute.xlu0 2
  %2504 = vperm.xlu0 %2503, %v2273
  %v2505 = vpop.permute.xlu0 %2504
  %2508 = vset.pattern.permute.xlu0 2
  %2509 = vperm.xlu0 %2508, %v2274
  %v2510 = vpop.permute.xlu0 %2509
  %2513 = vset.pattern.permute.xlu0 2
  %2514 = vperm.xlu0 %2513, %v2275
  %v2515 = vpop.permute.xlu0 %2514
  %2518 = vset.pattern.permute.xlu0 2
  %2519 = vperm.xlu0 %2518, %v2276
  %v2520 = vpop.permute.xlu0 %2519
  %2523 = vset.pattern.permute.xlu0 2
  %2524 = vperm.xlu0 %2523, %v2277
  %v2525 = vpop.permute.xlu0 %2524
  %2528 = vset.pattern.permute.xlu0 2
  %2529 = vperm.xlu0 %2528, %v2278
  %v2530 = vpop.permute.xlu0 %2529
  %2533 = vset.pattern.permute.xlu0 2
  %2534 = vperm.xlu0 %2533, %v2279
  %v2535 = vpop.permute.xlu0 %2534
  %2538 = vset.pattern.permute.xlu0 2
  %2539 = vperm.xlu0 %2538, %v2280
  %v2540 = vpop.permute.xlu0 %2539
  %2543 = vset.pattern.permute.xlu0 2
  %2544 = vperm.xlu0 %2543, %v2281
  %v2545 = vpop.permute.xlu0 %2544
  %2548 = vset.pattern.permute.xlu0 2
  %2549 = vperm.xlu0 %2548, %v2282
  %v2550 = vpop.permute.xlu0 %2549
  %2553 = vset.pattern.permute.xlu0 2
  %2554 = vperm.xlu0 %2553, %v2283
  %v2555 = vpop.permute.xlu0 %2554
  %2558 = vset.pattern.permute.xlu0 2
  %2559 = vperm.xlu0 %2558, %v2284
  %v2560 = vpop.permute.xlu0 %2559
  %2563 = vset.pattern.permute.xlu0 2
  %2564 = vperm.xlu0 %2563, %v2285
  %v2565 = vpop.permute.xlu0 %2564
  %2568 = vset.pattern.permute.xlu0 2
  %2569 = vperm.xlu0 %2568, %v2286
  %v2570 = vpop.permute.xlu0 %2569
  %2573 = vset.pattern.permute.xlu0 2
  %2574 = vperm.xlu0 %2573, %v2287
  %v2575 = vpop.permute.xlu0 %2574
  %2578 = vset.pattern.permute.xlu0 2
  %2579 = vperm.xlu0 %2578, %v2288
  %v2580 = vpop.permute.xlu0 %2579
  %2583 = vset.pattern.permute.xlu0 2
  %2584 = vperm.xlu0 %2583, %v2289
  %v2585 = vpop.permute.xlu0 %2584
  %2588 = vset.pattern.permute.xlu0 2
  %2589 = vperm.xlu0 %2588, %v2290
  %v2590 = vpop.permute.xlu0 %2589
  %2593 = vset.pattern.permute.xlu0 2
  %2594 = vperm.xlu0 %2593, %v2291
  %v2595 = vpop.permute.xlu0 %2594
  %2598 = vset.pattern.permute.xlu0 2
  %2599 = vperm.xlu0 %2598, %v2292
  %v2600 = vpop.permute.xlu0 %2599
  %2603 = vset.pattern.permute.xlu0 2
  %2604 = vperm.xlu0 %2603, %v2293
  %v2605 = vpop.permute.xlu0 %2604
  %2608 = vset.pattern.permute.xlu0 2
  %2609 = vperm.xlu0 %2608, %v2294
  %v2610 = vpop.permute.xlu0 %2609
  %2613 = vset.pattern.permute.xlu0 2
  %2614 = vperm.xlu0 %2613, %v2295
  %v2615 = vpop.permute.xlu0 %2614
  %2618 = vset.pattern.permute.xlu0 2
  %2619 = vperm.xlu0 %2618, %v2296
  %v2620 = vpop.permute.xlu0 %2619
  %2623 = vset.pattern.permute.xlu0 2
  %2624 = vperm.xlu0 %2623, %v2297
  %v2625 = vpop.permute.xlu0 %2624
  %2628 = vset.pattern.permute.xlu0 2
  %2629 = vperm.xlu0 %2628, %v2298
  %v2630 = vpop.permute.xlu0 %2629
  %2633 = vset.pattern.permute.xlu0 2
  %2634 = vperm.xlu0 %2633, %v2299
  %v2635 = vpop.permute.xlu0 %2634
  %2638 = vset.pattern.permute.xlu0 2
  %2639 = vperm.xlu0 %2638, %v2300
  %v2640 = vpop.permute.xlu0 %2639
  %v2642 = vmul.f32 %v1585, %v2490
  %v2643 = vmul.f32 %v1587, %v2490
  %v2644 = vmul.f32 %v1589, %v2495
  %v2645 = vmul.f32 %v1591, %v2495
  %v2646 = vmul.f32 %v1595, %v2500
  %v2647 = vmul.f32 %v1597, %v2500
  %v2648 = vmul.f32 %v1599, %v2505
  %v2649 = vmul.f32 %v1601, %v2505
  %v2650 = vmul.f32 %v1605, %v2510
  %v2651 = vmul.f32 %v1607, %v2510
  %v2652 = vmul.f32 %v1609, %v2515
  %v2653 = vmul.f32 %v1611, %v2515
  %v2654 = vmul.f32 %v1615, %v2520
  %v2655 = vmul.f32 %v1617, %v2520
  %v2656 = vmul.f32 %v1619, %v2525
  %v2657 = vmul.f32 %v1621, %v2525
  %v2658 = vmul.f32 %v1625, %v2530
  %v2659 = vmul.f32 %v1627, %v2530
  %v2660 = vmul.f32 %v1629, %v2535
  %v2661 = vmul.f32 %v1631, %v2535
  %v2662 = vmul.f32 %v1635, %v2540
  %v2663 = vmul.f32 %v1637, %v2540
  %v2664 = vmul.f32 %v1639, %v2545
  %v2665 = vmul.f32 %v1641, %v2545
  %v2666 = vmul.f32 %v1645, %v2550
  %v2667 = vmul.f32 %v1647, %v2550
  %v2668 = vmul.f32 %v1649, %v2555
  %v2669 = vmul.f32 %v1651, %v2555
  %v2670 = vmul.f32 %v1655, %v2560
  %v2671 = vmul.f32 %v1657, %v2560
  %v2672 = vmul.f32 %v1659, %v2565
  %v2673 = vmul.f32 %v1661, %v2565
  %v2674 = vmul.f32 %v1665, %v2570
  %v2675 = vmul.f32 %v1667, %v2570
  %v2676 = vmul.f32 %v1669, %v2575
  %v2677 = vmul.f32 %v1671, %v2575
  %v2678 = vmul.f32 %v1675, %v2580
  %v2679 = vmul.f32 %v1677, %v2580
  %v2680 = vmul.f32 %v1679, %v2585
  %v2681 = vmul.f32 %v1681, %v2585
  %v2682 = vmul.f32 %v1685, %v2590
  %v2683 = vmul.f32 %v1687, %v2590
  %v2684 = vmul.f32 %v1689, %v2595
  %v2685 = vmul.f32 %v1691, %v2595
  %v2686 = vmul.f32 %v1695, %v2600
  %v2687 = vmul.f32 %v1697, %v2600
  %v2688 = vmul.f32 %v1699, %v2605
  %v2689 = vmul.f32 %v1701, %v2605
  %v2690 = vmul.f32 %v1705, %v2610
  %v2691 = vmul.f32 %v1707, %v2610
  %v2692 = vmul.f32 %v1709, %v2615
  %v2693 = vmul.f32 %v1711, %v2615
  %v2694 = vmul.f32 %v1715, %v2620
  %v2695 = vmul.f32 %v1717, %v2620
  %v2696 = vmul.f32 %v1719, %v2625
  %v2697 = vmul.f32 %v1721, %v2625
  %v2698 = vmul.f32 %v1725, %v2630
  %v2699 = vmul.f32 %v1727, %v2630
  %v2700 = vmul.f32 %v1729, %v2635
  %v2701 = vmul.f32 %v1731, %v2635
  %v2702 = vmul.f32 %v1735, %v2640
  %v2703 = vmul.f32 %v1737, %v2640
  %2705 = vset.pattern.permute.xlu0 3
  %2706 = vperm.xlu0 %2705, %v2456
  %v2707 = vpop.permute.xlu0 %2706
  %2710 = vset.pattern.permute.xlu0 3
  %2711 = vperm.xlu0 %2710, %v2457
  %v2712 = vpop.permute.xlu0 %2711
  %2715 = vset.pattern.permute.xlu0 3
  %2716 = vperm.xlu0 %2715, %v2458
  %v2717 = vpop.permute.xlu0 %2716
  %2720 = vset.pattern.permute.xlu0 3
  %2721 = vperm.xlu0 %2720, %v2459
  %v2722 = vpop.permute.xlu0 %2721
  %2725 = vset.pattern.permute.xlu0 3
  %2726 = vperm.xlu0 %2725, %v2460
  %v2727 = vpop.permute.xlu0 %2726
  %2730 = vset.pattern.permute.xlu0 3
  %2731 = vperm.xlu0 %2730, %v2461
  %v2732 = vpop.permute.xlu0 %2731
  %2735 = vset.pattern.permute.xlu0 3
  %2736 = vperm.xlu0 %2735, %v2462
  %v2737 = vpop.permute.xlu0 %2736
  %2740 = vset.pattern.permute.xlu0 3
  %2741 = vperm.xlu0 %2740, %v2463
  %v2742 = vpop.permute.xlu0 %2741
  %2745 = vset.pattern.permute.xlu0 3
  %2746 = vperm.xlu0 %2745, %v2464
  %v2747 = vpop.permute.xlu0 %2746
  %2750 = vset.pattern.permute.xlu0 3
  %2751 = vperm.xlu0 %2750, %v2465
  %v2752 = vpop.permute.xlu0 %2751
  %2755 = vset.pattern.permute.xlu0 3
  %2756 = vperm.xlu0 %2755, %v2466
  %v2757 = vpop.permute.xlu0 %2756
  %2760 = vset.pattern.permute.xlu0 3
  %2761 = vperm.xlu0 %2760, %v2467
  %v2762 = vpop.permute.xlu0 %2761
  %2765 = vset.pattern.permute.xlu0 3
  %2766 = vperm.xlu0 %2765, %v2468
  %v2767 = vpop.permute.xlu0 %2766
  %2770 = vset.pattern.permute.xlu0 3
  %2771 = vperm.xlu0 %2770, %v2469
  %v2772 = vpop.permute.xlu0 %2771
  %2775 = vset.pattern.permute.xlu0 3
  %2776 = vperm.xlu0 %2775, %v2470
  %v2777 = vpop.permute.xlu0 %2776
  %2780 = vset.pattern.permute.xlu0 3
  %2781 = vperm.xlu0 %2780, %v2471
  %v2782 = vpop.permute.xlu0 %2781
  %2785 = vset.pattern.permute.xlu0 3
  %2786 = vperm.xlu0 %2785, %v2472
  %v2787 = vpop.permute.xlu0 %2786
  %2790 = vset.pattern.permute.xlu0 3
  %2791 = vperm.xlu0 %2790, %v2473
  %v2792 = vpop.permute.xlu0 %2791
  %2795 = vset.pattern.permute.xlu0 3
  %2796 = vperm.xlu0 %2795, %v2474
  %v2797 = vpop.permute.xlu0 %2796
  %2800 = vset.pattern.permute.xlu0 3
  %2801 = vperm.xlu0 %2800, %v2475
  %v2802 = vpop.permute.xlu0 %2801
  %2805 = vset.pattern.permute.xlu0 3
  %2806 = vperm.xlu0 %2805, %v2476
  %v2807 = vpop.permute.xlu0 %2806
  %2810 = vset.pattern.permute.xlu0 3
  %2811 = vperm.xlu0 %2810, %v2477
  %v2812 = vpop.permute.xlu0 %2811
  %2815 = vset.pattern.permute.xlu0 3
  %2816 = vperm.xlu0 %2815, %v2478
  %v2817 = vpop.permute.xlu0 %2816
  %2820 = vset.pattern.permute.xlu0 3
  %2821 = vperm.xlu0 %2820, %v2479
  %v2822 = vpop.permute.xlu0 %2821
  %2825 = vset.pattern.permute.xlu0 3
  %2826 = vperm.xlu0 %2825, %v2480
  %v2827 = vpop.permute.xlu0 %2826
  %2830 = vset.pattern.permute.xlu0 3
  %2831 = vperm.xlu0 %2830, %v2481
  %v2832 = vpop.permute.xlu0 %2831
  %2835 = vset.pattern.permute.xlu0 3
  %2836 = vperm.xlu0 %2835, %v2482
  %v2837 = vpop.permute.xlu0 %2836
  %2840 = vset.pattern.permute.xlu0 3
  %2841 = vperm.xlu0 %2840, %v2483
  %v2842 = vpop.permute.xlu0 %2841
  %2845 = vset.pattern.permute.xlu0 3
  %2846 = vperm.xlu0 %2845, %v2484
  %v2847 = vpop.permute.xlu0 %2846
  %2850 = vset.pattern.permute.xlu0 3
  %2851 = vperm.xlu0 %2850, %v2485
  %v2852 = vpop.permute.xlu0 %2851
  %2855 = vset.pattern.permute.xlu0 3
  %2856 = vperm.xlu0 %2855, %v2486
  %v2857 = vpop.permute.xlu0 %2856
  %v2859 = vadd.f32 %v2642, %v2707
  %v2860 = vadd.f32 %v2643, %v2707
  %v2861 = vadd.f32 %v2644, %v2712
  %v2862 = vadd.f32 %v2645, %v2712
  %v2863 = vadd.f32 %v2646, %v2717
  %v2864 = vadd.f32 %v2647, %v2717
  %v2865 = vadd.f32 %v2648, %v2722
  %v2866 = vadd.f32 %v2649, %v2722
  %v2867 = vadd.f32 %v2650, %v2727
  %v2868 = vadd.f32 %v2651, %v2727
  %v2869 = vadd.f32 %v2652, %v2732
  %v2870 = vadd.f32 %v2653, %v2732
  %v2871 = vadd.f32 %v2654, %v2737
  %v2872 = vadd.f32 %v2655, %v2737
  %v2873 = vadd.f32 %v2656, %v2742
  %v2874 = vadd.f32 %v2657, %v2742
  %v2875 = vadd.f32 %v2658, %v2747
  %v2876 = vadd.f32 %v2659, %v2747
  %v2877 = vadd.f32 %v2660, %v2752
  %v2878 = vadd.f32 %v2661, %v2752
  %v2879 = vadd.f32 %v2662, %v2757
  %v2880 = vadd.f32 %v2663, %v2757
  %v2881 = vadd.f32 %v2664, %v2762
  %v2882 = vadd.f32 %v2665, %v2762
  %v2883 = vadd.f32 %v2666, %v2767
  %v2884 = vadd.f32 %v2667, %v2767
  %v2885 = vadd.f32 %v2668, %v2772
  %v2886 = vadd.f32 %v2669, %v2772
  %v2887 = vadd.f32 %v2670, %v2777
  %v2888 = vadd.f32 %v2671, %v2777
  %v2889 = vadd.f32 %v2672, %v2782
  %v2890 = vadd.f32 %v2673, %v2782
  %v2891 = vadd.f32 %v2674, %v2787
  %v2892 = vadd.f32 %v2675, %v2787
  %v2893 = vadd.f32 %v2676, %v2792
  %v2894 = vadd.f32 %v2677, %v2792
  %v2895 = vadd.f32 %v2678, %v2797
  %v2896 = vadd.f32 %v2679, %v2797
  %v2897 = vadd.f32 %v2680, %v2802
  %v2898 = vadd.f32 %v2681, %v2802
  %v2899 = vadd.f32 %v2682, %v2807
  %v2900 = vadd.f32 %v2683, %v2807
  %v2901 = vadd.f32 %v2684, %v2812
  %v2902 = vadd.f32 %v2685, %v2812
  %v2903 = vadd.f32 %v2686, %v2817
  %v2904 = vadd.f32 %v2687, %v2817
  %v2905 = vadd.f32 %v2688, %v2822
  %v2906 = vadd.f32 %v2689, %v2822
  %v2907 = vadd.f32 %v2690, %v2827
  %v2908 = vadd.f32 %v2691, %v2827
  %v2909 = vadd.f32 %v2692, %v2832
  %v2910 = vadd.f32 %v2693, %v2832
  %v2911 = vadd.f32 %v2694, %v2837
  %v2912 = vadd.f32 %v2695, %v2837
  %v2913 = vadd.f32 %v2696, %v2842
  %v2914 = vadd.f32 %v2697, %v2842
  %v2915 = vadd.f32 %v2698, %v2847
  %v2916 = vadd.f32 %v2699, %v2847
  %v2917 = vadd.f32 %v2700, %v2852
  %v2918 = vadd.f32 %v2701, %v2852
  %v2919 = vadd.f32 %v2702, %v2857
  %v2920 = vadd.f32 %v2703, %v2857
  %2921 = vst [vmem:[%s3] sm:$0xff] %v2859
  %2922 = vst.msk [vmem:[%s3 + $0x8] sm:$0xff] %vm107, %v2860
  %2923 = vst [vmem:[%s3 + $0x10] sm:$0xff] %v2861
  %2924 = vst.msk [vmem:[%s3 + $0x18] sm:$0xff] %vm107, %v2862
  %2925 = vst [vmem:[%s3 + $0x20] sm:$0xff] %v2863
  %2926 = vst.msk [vmem:[%s3 + $0x28] sm:$0xff] %vm107, %v2864
  %2927 = vst [vmem:[%s3 + $0x30] sm:$0xff] %v2865
  %2928 = vst.msk [vmem:[%s3 + $0x38] sm:$0xff] %vm107, %v2866
  %2929 = vst [vmem:[%s3 + $0x40] sm:$0xff] %v2867
  %2930 = vst.msk [vmem:[%s3 + $0x48] sm:$0xff] %vm107, %v2868
  %2931 = vst [vmem:[%s3 + $0x50] sm:$0xff] %v2869
  %2932 = vst.msk [vmem:[%s3 + $0x58] sm:$0xff] %vm107, %v2870
  %2933 = vst [vmem:[%s3 + $0x60] sm:$0xff] %v2871
  %2934 = vst.msk [vmem:[%s3 + $0x68] sm:$0xff] %vm107, %v2872
  %2935 = vst [vmem:[%s3 + $0x70] sm:$0xff] %v2873
  %2936 = vst.msk [vmem:[%s3 + $0x78] sm:$0xff] %vm107, %v2874
  %2937 = vst [vmem:[%s3 + $0x80] sm:$0xff] %v2875
  %2938 = vst.msk [vmem:[%s3 + $0x88] sm:$0xff] %vm107, %v2876
  %2939 = vst [vmem:[%s3 + $0x90] sm:$0xff] %v2877
  %2940 = vst.msk [vmem:[%s3 + $0x98] sm:$0xff] %vm107, %v2878
  %2941 = vst [vmem:[%s3 + $0xa0] sm:$0xff] %v2879
  %2942 = vst.msk [vmem:[%s3 + $0xa8] sm:$0xff] %vm107, %v2880
  %2943 = vst [vmem:[%s3 + $0xb0] sm:$0xff] %v2881
  %2944 = vst.msk [vmem:[%s3 + $0xb8] sm:$0xff] %vm107, %v2882
  %2945 = vst [vmem:[%s3 + $0xc0] sm:$0xff] %v2883
  %2946 = vst.msk [vmem:[%s3 + $0xc8] sm:$0xff] %vm107, %v2884
  %2947 = vst [vmem:[%s3 + $0xd0] sm:$0xff] %v2885
  %2948 = vst.msk [vmem:[%s3 + $0xd8] sm:$0xff] %vm107, %v2886
  %2949 = vst [vmem:[%s3 + $0xe0] sm:$0xff] %v2887
  %2950 = vst.msk [vmem:[%s3 + $0xe8] sm:$0xff] %vm107, %v2888
  %2951 = vst [vmem:[%s3 + $0xf0] sm:$0xff] %v2889
  %2952 = vst.msk [vmem:[%s3 + $0xf8] sm:$0xff] %vm107, %v2890
  %2953 = vst [vmem:[%s3 + $0x100] sm:$0xff] %v2891
  %2954 = vst.msk [vmem:[%s3 + $0x108] sm:$0xff] %vm107, %v2892
  %2955 = vst [vmem:[%s3 + $0x110] sm:$0xff] %v2893
  %2956 = vst.msk [vmem:[%s3 + $0x118] sm:$0xff] %vm107, %v2894
  %2957 = vst [vmem:[%s3 + $0x120] sm:$0xff] %v2895
  %2958 = vst.msk [vmem:[%s3 + $0x128] sm:$0xff] %vm107, %v2896
  %2959 = vst [vmem:[%s3 + $0x130] sm:$0xff] %v2897
  %2960 = vst.msk [vmem:[%s3 + $0x138] sm:$0xff] %vm107, %v2898
  %2961 = vst [vmem:[%s3 + $0x140] sm:$0xff] %v2899
  %2962 = vst.msk [vmem:[%s3 + $0x148] sm:$0xff] %vm107, %v2900
  %2963 = vst [vmem:[%s3 + $0x150] sm:$0xff] %v2901
  %2964 = vst.msk [vmem:[%s3 + $0x158] sm:$0xff] %vm107, %v2902
  %2965 = vst [vmem:[%s3 + $0x160] sm:$0xff] %v2903
  %2966 = vst.msk [vmem:[%s3 + $0x168] sm:$0xff] %vm107, %v2904
  %2967 = vst [vmem:[%s3 + $0x170] sm:$0xff] %v2905
  %2968 = vst.msk [vmem:[%s3 + $0x178] sm:$0xff] %vm107, %v2906
  %2969 = vst [vmem:[%s3 + $0x180] sm:$0xff] %v2907
  %2970 = vst.msk [vmem:[%s3 + $0x188] sm:$0xff] %vm107, %v2908
  %2971 = vst [vmem:[%s3 + $0x190] sm:$0xff] %v2909
  %2972 = vst.msk [vmem:[%s3 + $0x198] sm:$0xff] %vm107, %v2910
  %2973 = vst [vmem:[%s3 + $0x1a0] sm:$0xff] %v2911
  %2974 = vst.msk [vmem:[%s3 + $0x1a8] sm:$0xff] %vm107, %v2912
  %2975 = vst [vmem:[%s3 + $0x1b0] sm:$0xff] %v2913
  %2976 = vst.msk [vmem:[%s3 + $0x1b8] sm:$0xff] %vm107, %v2914
  %2977 = vst [vmem:[%s3 + $0x1c0] sm:$0xff] %v2915
  %2978 = vst.msk [vmem:[%s3 + $0x1c8] sm:$0xff] %vm107, %v2916
  %2979 = vst [vmem:[%s3 + $0x1d0] sm:$0xff] %v2917
  %2980 = vst.msk [vmem:[%s3 + $0x1d8] sm:$0xff] %vm107, %v2918
  %2981 = vst [vmem:[%s3 + $0x1e0] sm:$0xf] %v2919
  %2982 = vst.msk [vmem:[%s3 + $0x1e8] sm:$0xf] %vm230, %v2920
  // Predicated region
  $region14: #{_bn_conv_bn_impl.1} parent=0 // pred_check
    _
  $region15: #{_bn_conv_bn_impl.1} parent=0 // pred_check_branch
    %2984 = sbr.rel (0) target = $region17
  $region16: #{_bn_conv_bn_impl.1} parent=0 // pred_region
    _
  $region17: #{_bn_conv_bn_impl.1} parent=0 // pred_fallthru
    _
  // Predicated region
  $region18: #{_bn_conv_bn_impl.1} parent=0 // pred_check
    _
  $region19: #{_bn_conv_bn_impl.1} parent=0 // pred_check_branch
    %2986 = sbr.rel (0) target = $region21
  $region20: #{_bn_conv_bn_impl.1} parent=0 // pred_region
    _
  $region21: #{_bn_conv_bn_impl.1} parent=0 // pred_fallthru
    _

</llo_original>
